<compile_context>
chip_gen: v7x
topology: tpu7x:2x2x1
jax: 0.10.0
libtpu: 0.0.40
codegen_flags: <defaults>
</compile_context>

<pallas_src>
import math
import numpy as np

import jax
import jax.numpy as jnp
from jax import lax
from jax.experimental import pallas as pl
from jax.experimental.pallas import tpu as pltpu

WS = 5          # window_size
SIGMA = 1.5     # gaussian sigma
PAD = WS // 2   # 2


def _gaussian_1d():
    """Exactly reproduces gaussian(5, 1.5) from the reference (normalized 1-D taps)."""
    g = np.array(
        [math.exp(-((x - WS // 2) ** 2) / float(2 * SIGMA ** 2)) for x in range(WS)],
        dtype=np.float32,
    )
    g = (g / g.sum()).astype(np.float32)
    return [float(v) for v in g]


def _row_pitch(H, W):
    """Smallest padded row pitch >= W + 2*PAD whose H-row slab length is a 128 multiple."""
    base = W + 2 * PAD
    limit = max(base + 1, 2 * base)          # don't blow up tiny-H slabs just for alignment
    for cand in range(base, base + 129):
        if (H * cand) % 128 == 0:
            return cand if cand <= limit else base
    return base


def _round_up(x, m):
    return (x + m - 1) // m * m


def differential_divergence_loss(pred, true, static_ch,
                                 tau=1.0, epsilon=1e-8,
                                 w1=1.0, w2=1.0, w3=1.0, w4=0.0, w5=1.0):
    """pred, true: (B, T, C, H, W) float32; static_ch broadcastable to (B, 1, 1, H, W)."""
    B, T, C, H, W = pred.shape
    WP = _row_pitch(H, W)                    # lane-friendly padded row pitch
    HP = H + 2 * PAD
    TP = T + 2 * PAD
    HWP = H * WP                             # flat length of the H output rows
    HPWP = HP * WP                           # flat length of all padded rows
    SB = _round_up(HPWP + (WS - 1), 128)     # block pitch: 128-multiple, >= HPWP+4 tail guard
    G = _gaussian_1d()
    # torch.std is unbiased over T.
    # TODO(synk): T==1 returns 0 for the std term instead of torch's NaN (intentional deviation).
    tden = float(T - 1) if T > 1 else 1.0
    inv_t = 1.0 / float(T)
    inv_tden = 1.0 / tden

    # ---- wrapper layout plumbing (transpose + zero pads + free reshapes), no compute ----
    def to_slab(v):
        v = jnp.transpose(v.astype(jnp.float32), (0, 2, 1, 3, 4))            # (B, C, T, H, W)
        v = jnp.pad(v, ((0, 0), (0, 0), (PAD, PAD), (PAD, PAD), (PAD, WP - W - PAD)))
        v = v.reshape(B, C, TP, HPWP)
        return jnp.pad(v, ((0, 0), (0, 0), (0, 0), (0, SB - HPWP)))          # (B, C, TP, SB)

    predf = to_slab(pred)
    truef = to_slab(true)
    # static_ch doubles as the mask for the (WP - W) junk columns of every flat output row
    sc3 = jnp.broadcast_to(static_ch.astype(jnp.float32), (B, 1, 1, H, W)).reshape(B, H, W)
    scf = jnp.pad(sc3, ((0, 0), (0, 0), (0, WP - W))).reshape(B, 1, HWP)

    def kernel(sc_ref, p_ref, t_ref, out_ref):
        x = p_ref[...]                        # (TP, SB) fully zero-padded pred slab
        y = t_ref[...]                        # (TP, SB) fully zero-padded true slab
        scv = sc_ref[...]                     # (1, HWP), zero in junk / pad columns

        xx = x * x
        yy = y * y

        # --- separable 5x5x5 gaussian: one W-pass + one H-pass on the sublane-packed slab ---
        packed = jnp.concatenate([x, y, xx, yy], axis=0)     # (4*TP, SB): exact 8-sublane tiles
        a = G[0] * packed[:, 0:HPWP]                          # W pass
        for d in range(1, WS):
            a = a + G[d] * packed[:, d:d + HPWP]
        b = G[0] * a[:, 0:HWP]                                # H pass
        for d in range(1, WS):
            b = b + G[d] * a[:, d * WP:d * WP + HWP]

        def tpass(f):                                         # T pass (split per packed field)
            bb = b[f * TP:(f + 1) * TP, :]
            c0 = G[0] * bb[0:T, :]
            for d in range(1, WS):
                c0 = c0 + G[d] * bb[d:d + T, :]
            return c0

        mu1, mu2, ep2, et2 = tpass(0), tpass(1), tpass(2), tpass(3)

        sig1 = jnp.maximum(ep2 - mu1 * mu1, 1e-8)             # torch.clamp(min=1e-8)
        sig2 = jnp.maximum(et2 - mu2 * mu2, 1e-8)

        d12 = (mu1 - mu2) * scv
        dss = (jnp.sqrt(sig1) - jnp.sqrt(sig2)) * scv
        s1 = jnp.sum(d12 * d12)                               # ssim_map_1 numerator
        s2 = jnp.sum(dss * dss)                               # ssim_map_2 numerator
        s3 = jnp.sum(jnp.abs(x - y))                          # L1 numerator (pads give 0)
        s4 = jnp.sum(x)                                       # sum(pred)      (pads give 0)

        # unbiased std over T via one-pass sums (all pad positions contribute exactly 0)
        sx = jnp.sum(x, axis=0, keepdims=True)
        sxx = jnp.sum(xx, axis=0, keepdims=True)
        sy = jnp.sum(y, axis=0, keepdims=True)
        syy = jnp.sum(yy, axis=0, keepdims=True)
        varx = jnp.maximum(sxx - sx * sx * inv_t, 0.0) * inv_tden
        vary = jnp.maximum(syy - sy * sy * inv_t, 0.0) * inv_tden
        dstd = jnp.sqrt(varx) - jnp.sqrt(vary)
        s5 = jnp.sum(dstd * dstd)                             # std-loss numerator

        # lane-dense per-program output tile: row k of the (8,128) tile holds partial sum k
        ri = lax.broadcasted_iota(jnp.int32, (8, 128), 0)
        tile = jnp.zeros((8, 128), jnp.float32)
        for k, v in enumerate((s1, s2, s3, s4, s5)):
            tile = jnp.where(ri == k, v, tile)
        out_ref[...] = tile

    out = pl.pallas_call(
        kernel,
        out_shape=jax.ShapeDtypeStruct((B, C, 8, 128), jnp.float32),
        grid_spec=pltpu.PrefetchScalarGridSpec(
            num_scalar_prefetch=0,
            grid=(B, C),
            in_specs=[
                pl.BlockSpec((None, 1, HWP), lambda b, c: (b, 0, 0)),            # static mask
                pl.BlockSpec((None, None, TP, SB), lambda b, c: (b, c, 0, 0)),   # pred slab
                pl.BlockSpec((None, None, TP, SB), lambda b, c: (b, c, 0, 0)),   # true slab
            ],
            out_specs=pl.BlockSpec((None, None, 8, 128), lambda b, c: (b, c, 0, 0)),
        ),
        compiler_params=pltpu.CompilerParams(
            dimension_semantics=("parallel", "parallel"),
            vmem_limit_bytes=32 * 1024 * 1024,
        ),
    )(scf, predf, truef)

    # ---- glue: fold per-(b, c) partial sums and finalize scalar losses ----
    sums = jnp.sum(out[:, :, :5, 0], axis=(0, 1))
    n_all = float(B * C * T * H * W)
    mse_loss = sums[0] / n_all                 # ssim_map_1
    reg_mse = sums[1] / n_all                  # ssim_map_2
    reg_std = sums[2] / n_all                  # ssim_map_3 (L1)
    sum_loss = sums[3] / n_all                 # mean(pred)
    std_loss = sums[4] / float(B * C * H * W)  # mse of std over T

    train_loss = (w1 * mse_loss + w2 * reg_mse + w3 * reg_std
                  + w4 * std_loss + w5 * sum_loss)
    total_loss = mse_loss + reg_mse + reg_std + std_loss + w5 * sum_loss
    return [train_loss, total_loss, w1 * mse_loss, w2 * reg_mse,
            w3 * reg_std, w4 * std_loss, sum_loss * w5]


if __name__ == "__main__":
    key = jax.random.PRNGKey(0)
    k1, k2, k3 = jax.random.split(key, 3)
    B, T, C, H, W = 2, 8, 4, 16, 16
    pred = jax.random.normal(k1, (B, T, C, H, W), dtype=jnp.float32)
    true = jax.random.normal(k2, (B, T, C, H, W), dtype=jnp.float32)
    static_ch = jax.random.uniform(k3, (B, 1, 1, H, W), dtype=jnp.float32)

    losses = differential_divergence_loss(pred, true, static_ch)
    losses = jax.block_until_ready(losses)
    print("KERNEL_OK")
</pallas_src>

<mosaic_0001>
module attributes {stable_mosaic.version = 11 : i64} {
  func.func @kernel(%arg0: i32, %arg1: i32, %arg2: memref<1x1x384xf32, #tpu.memory_space<vmem>>, %arg3: memref<1x1x12x512xf32, #tpu.memory_space<vmem>>, %arg4: memref<1x1x12x512xf32, #tpu.memory_space<vmem>>, %arg5: memref<1x1x8x128xf32, #tpu.memory_space<vmem>>) attributes {dimension_semantics = [#tpu.dimension_semantics<parallel>, #tpu.dimension_semantics<parallel>], iteration_bounds = array<i64: 2, 4>, scalar_prefetch = 0 : i64, scratch_operands = 0 : i64, tpu.core_type = #tpu.core_type<tc>, window_params = [{transform_indices = @transform_0, window_bounds = array<i64: 1, 1, 384>}, {transform_indices = @transform_1, window_bounds = array<i64: 1, 1, 12, 512>}, {transform_indices = @transform_2, window_bounds = array<i64: 1, 1, 12, 512>}, {transform_indices = @transform_3, window_bounds = array<i64: 1, 1, 8, 128>}]} {
    %c0 = arith.constant 0 : index
    %c0_0 = arith.constant 0 : index
    %c0_1 = arith.constant 0 : index
    %c0_2 = arith.constant 0 : index
    %0 = vector.load %arg3[%c0, %c0_0, %c0_1, %c0_2] : memref<1x1x12x512xf32, #tpu.memory_space<vmem>>, vector<1x1x12x512xf32>
    %1 = vector.shape_cast %0 : vector<1x1x12x512xf32> to vector<12x512xf32>
    %c0_3 = arith.constant 0 : index
    %c0_4 = arith.constant 0 : index
    %c0_5 = arith.constant 0 : index
    %c0_6 = arith.constant 0 : index
    %2 = vector.load %arg4[%c0_3, %c0_4, %c0_5, %c0_6] : memref<1x1x12x512xf32, #tpu.memory_space<vmem>>, vector<1x1x12x512xf32>
    %3 = vector.shape_cast %2 : vector<1x1x12x512xf32> to vector<12x512xf32>
    %c0_7 = arith.constant 0 : index
    %c0_8 = arith.constant 0 : index
    %c0_9 = arith.constant 0 : index
    %4 = vector.load %arg2[%c0_7, %c0_8, %c0_9] : memref<1x1x384xf32, #tpu.memory_space<vmem>>, vector<1x1x384xf32>
    %5 = vector.shape_cast %4 : vector<1x1x384xf32> to vector<1x384xf32>
    %6 = arith.mulf %1, %1 : vector<12x512xf32>
    %7 = arith.mulf %3, %3 : vector<12x512xf32>
    %8 = tpu.concatenate %1, %3, %6, %7 in 0 : vector<12x512xf32>, vector<12x512xf32>, vector<12x512xf32>, vector<12x512xf32> -> vector<48x512xf32>
    %9 = vector.extract_strided_slice %8 {offsets = [0, 0], sizes = [48, 480], strides = [1, 1]} : vector<48x512xf32> to vector<48x480xf32>
    %cst = arith.constant 0.120078377 : f32
    %10 = vector.broadcast %cst : f32 to vector<48x480xf32>
    %11 = arith.mulf %10, %9 : vector<48x480xf32>
    %12 = vector.extract_strided_slice %8 {offsets = [0, 1], sizes = [48, 480], strides = [1, 1]} : vector<48x512xf32> to vector<48x480xf32>
    %cst_10 = arith.constant 0.233880743 : f32
    %13 = vector.broadcast %cst_10 : f32 to vector<48x480xf32>
    %14 = arith.mulf %13, %12 : vector<48x480xf32>
    %15 = arith.addf %11, %14 : vector<48x480xf32>
    %16 = vector.extract_strided_slice %8 {offsets = [0, 2], sizes = [48, 480], strides = [1, 1]} : vector<48x512xf32> to vector<48x480xf32>
    %cst_11 = arith.constant 0.292081714 : f32
    %17 = vector.broadcast %cst_11 : f32 to vector<48x480xf32>
    %18 = arith.mulf %17, %16 : vector<48x480xf32>
    %19 = arith.addf %15, %18 : vector<48x480xf32>
    %20 = vector.extract_strided_slice %8 {offsets = [0, 3], sizes = [48, 480], strides = [1, 1]} : vector<48x512xf32> to vector<48x480xf32>
    %cst_12 = arith.constant 0.233880743 : f32
    %21 = vector.broadcast %cst_12 : f32 to vector<48x480xf32>
    %22 = arith.mulf %21, %20 : vector<48x480xf32>
    %23 = arith.addf %19, %22 : vector<48x480xf32>
    %24 = vector.extract_strided_slice %8 {offsets = [0, 4], sizes = [48, 480], strides = [1, 1]} : vector<48x512xf32> to vector<48x480xf32>
    %cst_13 = arith.constant 0.120078377 : f32
    %25 = vector.broadcast %cst_13 : f32 to vector<48x480xf32>
    %26 = arith.mulf %25, %24 : vector<48x480xf32>
    %27 = arith.addf %23, %26 : vector<48x480xf32>
    %28 = vector.extract_strided_slice %27 {offsets = [0, 0], sizes = [48, 384], strides = [1, 1]} : vector<48x480xf32> to vector<48x384xf32>
    %cst_14 = arith.constant 0.120078377 : f32
    %29 = vector.broadcast %cst_14 : f32 to vector<48x384xf32>
    %30 = arith.mulf %29, %28 : vector<48x384xf32>
    %31 = vector.extract_strided_slice %27 {offsets = [0, 24], sizes = [48, 384], strides = [1, 1]} : vector<48x480xf32> to vector<48x384xf32>
    %cst_15 = arith.constant 0.233880743 : f32
    %32 = vector.broadcast %cst_15 : f32 to vector<48x384xf32>
    %33 = arith.mulf %32, %31 : vector<48x384xf32>
    %34 = arith.addf %30, %33 : vector<48x384xf32>
    %35 = vector.extract_strided_slice %27 {offsets = [0, 48], sizes = [48, 384], strides = [1, 1]} : vector<48x480xf32> to vector<48x384xf32>
    %cst_16 = arith.constant 0.292081714 : f32
    %36 = vector.broadcast %cst_16 : f32 to vector<48x384xf32>
    %37 = arith.mulf %36, %35 : vector<48x384xf32>
    %38 = arith.addf %34, %37 : vector<48x384xf32>
    %39 = vector.extract_strided_slice %27 {offsets = [0, 72], sizes = [48, 384], strides = [1, 1]} : vector<48x480xf32> to vector<48x384xf32>
    %cst_17 = arith.constant 0.233880743 : f32
    %40 = vector.broadcast %cst_17 : f32 to vector<48x384xf32>
    %41 = arith.mulf %40, %39 : vector<48x384xf32>
    %42 = arith.addf %38, %41 : vector<48x384xf32>
    %43 = vector.extract_strided_slice %27 {offsets = [0, 96], sizes = [48, 384], strides = [1, 1]} : vector<48x480xf32> to vector<48x384xf32>
    %cst_18 = arith.constant 0.120078377 : f32
    %44 = vector.broadcast %cst_18 : f32 to vector<48x384xf32>
    %45 = arith.mulf %44, %43 : vector<48x384xf32>
    %46 = arith.addf %42, %45 : vector<48x384xf32>
    %47 = vector.extract_strided_slice %46 {offsets = [0, 0], sizes = [12, 384], strides = [1, 1]} : vector<48x384xf32> to vector<12x384xf32>
    %48 = vector.extract_strided_slice %47 {offsets = [0, 0], sizes = [8, 384], strides = [1, 1]} : vector<12x384xf32> to vector<8x384xf32>
    %cst_19 = arith.constant 0.120078377 : f32
    %49 = vector.broadcast %cst_19 : f32 to vector<8x384xf32>
    %50 = arith.mulf %49, %48 : vector<8x384xf32>
    %51 = vector.extract_strided_slice %47 {offsets = [1, 0], sizes = [8, 384], strides = [1, 1]} : vector<12x384xf32> to vector<8x384xf32>
    %cst_20 = arith.constant 0.233880743 : f32
    %52 = vector.broadcast %cst_20 : f32 to vector<8x384xf32>
    %53 = arith.mulf %52, %51 : vector<8x384xf32>
    %54 = arith.addf %50, %53 : vector<8x384xf32>
    %55 = vector.extract_strided_slice %47 {offsets = [2, 0], sizes = [8, 384], strides = [1, 1]} : vector<12x384xf32> to vector<8x384xf32>
    %cst_21 = arith.constant 0.292081714 : f32
    %56 = vector.broadcast %cst_21 : f32 to vector<8x384xf32>
    %57 = arith.mulf %56, %55 : vector<8x384xf32>
    %58 = arith.addf %54, %57 : vector<8x384xf32>
    %59 = vector.extract_strided_slice %47 {offsets = [3, 0], sizes = [8, 384], strides = [1, 1]} : vector<12x384xf32> to vector<8x384xf32>
    %cst_22 = arith.constant 0.233880743 : f32
    %60 = vector.broadcast %cst_22 : f32 to vector<8x384xf32>
    %61 = arith.mulf %60, %59 : vector<8x384xf32>
    %62 = arith.addf %58, %61 : vector<8x384xf32>
    %63 = vector.extract_strided_slice %47 {offsets = [4, 0], sizes = [8, 384], strides = [1, 1]} : vector<12x384xf32> to vector<8x384xf32>
    %cst_23 = arith.constant 0.120078377 : f32
    %64 = vector.broadcast %cst_23 : f32 to vector<8x384xf32>
    %65 = arith.mulf %64, %63 : vector<8x384xf32>
    %66 = arith.addf %62, %65 : vector<8x384xf32>
    %67 = vector.extract_strided_slice %46 {offsets = [12, 0], sizes = [12, 384], strides = [1, 1]} : vector<48x384xf32> to vector<12x384xf32>
    %68 = vector.extract_strided_slice %67 {offsets = [0, 0], sizes = [8, 384], strides = [1, 1]} : vector<12x384xf32> to vector<8x384xf32>
    %cst_24 = arith.constant 0.120078377 : f32
    %69 = vector.broadcast %cst_24 : f32 to vector<8x384xf32>
    %70 = arith.mulf %69, %68 : vector<8x384xf32>
    %71 = vector.extract_strided_slice %67 {offsets = [1, 0], sizes = [8, 384], strides = [1, 1]} : vector<12x384xf32> to vector<8x384xf32>
    %cst_25 = arith.constant 0.233880743 : f32
    %72 = vector.broadcast %cst_25 : f32 to vector<8x384xf32>
    %73 = arith.mulf %72, %71 : vector<8x384xf32>
    %74 = arith.addf %70, %73 : vector<8x384xf32>
    %75 = vector.extract_strided_slice %67 {offsets = [2, 0], sizes = [8, 384], strides = [1, 1]} : vector<12x384xf32> to vector<8x384xf32>
    %cst_26 = arith.constant 0.292081714 : f32
    %76 = vector.broadcast %cst_26 : f32 to vector<8x384xf32>
    %77 = arith.mulf %76, %75 : vector<8x384xf32>
    %78 = arith.addf %74, %77 : vector<8x384xf32>
    %79 = vector.extract_strided_slice %67 {offsets = [3, 0], sizes = [8, 384], strides = [1, 1]} : vector<12x384xf32> to vector<8x384xf32>
    %cst_27 = arith.constant 0.233880743 : f32
    %80 = vector.broadcast %cst_27 : f32 to vector<8x384xf32>
    %81 = arith.mulf %80, %79 : vector<8x384xf32>
    %82 = arith.addf %78, %81 : vector<8x384xf32>
    %83 = vector.extract_strided_slice %67 {offsets = [4, 0], sizes = [8, 384], strides = [1, 1]} : vector<12x384xf32> to vector<8x384xf32>
    %cst_28 = arith.constant 0.120078377 : f32
    %84 = vector.broadcast %cst_28 : f32 to vector<8x384xf32>
    %85 = arith.mulf %84, %83 : vector<8x384xf32>
    %86 = arith.addf %82, %85 : vector<8x384xf32>
    %87 = vector.extract_strided_slice %46 {offsets = [24, 0], sizes = [12, 384], strides = [1, 1]} : vector<48x384xf32> to vector<12x384xf32>
    %88 = vector.extract_strided_slice %87 {offsets = [0, 0], sizes = [8, 384], strides = [1, 1]} : vector<12x384xf32> to vector<8x384xf32>
    %cst_29 = arith.constant 0.120078377 : f32
    %89 = vector.broadcast %cst_29 : f32 to vector<8x384xf32>
    %90 = arith.mulf %89, %88 : vector<8x384xf32>
    %91 = vector.extract_strided_slice %87 {offsets = [1, 0], sizes = [8, 384], strides = [1, 1]} : vector<12x384xf32> to vector<8x384xf32>
    %cst_30 = arith.constant 0.233880743 : f32
    %92 = vector.broadcast %cst_30 : f32 to vector<8x384xf32>
    %93 = arith.mulf %92, %91 : vector<8x384xf32>
    %94 = arith.addf %90, %93 : vector<8x384xf32>
    %95 = vector.extract_strided_slice %87 {offsets = [2, 0], sizes = [8, 384], strides = [1, 1]} : vector<12x384xf32> to vector<8x384xf32>
    %cst_31 = arith.constant 0.292081714 : f32
    %96 = vector.broadcast %cst_31 : f32 to vector<8x384xf32>
    %97 = arith.mulf %96, %95 : vector<8x384xf32>
    %98 = arith.addf %94, %97 : vector<8x384xf32>
    %99 = vector.extract_strided_slice %87 {offsets = [3, 0], sizes = [8, 384], strides = [1, 1]} : vector<12x384xf32> to vector<8x384xf32>
    %cst_32 = arith.constant 0.233880743 : f32
    %100 = vector.broadcast %cst_32 : f32 to vector<8x384xf32>
    %101 = arith.mulf %100, %99 : vector<8x384xf32>
    %102 = arith.addf %98, %101 : vector<8x384xf32>
    %103 = vector.extract_strided_slice %87 {offsets = [4, 0], sizes = [8, 384], strides = [1, 1]} : vector<12x384xf32> to vector<8x384xf32>
    %cst_33 = arith.constant 0.120078377 : f32
    %104 = vector.broadcast %cst_33 : f32 to vector<8x384xf32>
    %105 = arith.mulf %104, %103 : vector<8x384xf32>
    %106 = arith.addf %102, %105 : vector<8x384xf32>
    %107 = vector.extract_strided_slice %46 {offsets = [36, 0], sizes = [12, 384], strides = [1, 1]} : vector<48x384xf32> to vector<12x384xf32>
    %108 = vector.extract_strided_slice %107 {offsets = [0, 0], sizes = [8, 384], strides = [1, 1]} : vector<12x384xf32> to vector<8x384xf32>
    %cst_34 = arith.constant 0.120078377 : f32
    %109 = vector.broadcast %cst_34 : f32 to vector<8x384xf32>
    %110 = arith.mulf %109, %108 : vector<8x384xf32>
    %111 = vector.extract_strided_slice %107 {offsets = [1, 0], sizes = [8, 384], strides = [1, 1]} : vector<12x384xf32> to vector<8x384xf32>
    %cst_35 = arith.constant 0.233880743 : f32
    %112 = vector.broadcast %cst_35 : f32 to vector<8x384xf32>
    %113 = arith.mulf %112, %111 : vector<8x384xf32>
    %114 = arith.addf %110, %113 : vector<8x384xf32>
    %115 = vector.extract_strided_slice %107 {offsets = [2, 0], sizes = [8, 384], strides = [1, 1]} : vector<12x384xf32> to vector<8x384xf32>
    %cst_36 = arith.constant 0.292081714 : f32
    %116 = vector.broadcast %cst_36 : f32 to vector<8x384xf32>
    %117 = arith.mulf %116, %115 : vector<8x384xf32>
    %118 = arith.addf %114, %117 : vector<8x384xf32>
    %119 = vector.extract_strided_slice %107 {offsets = [3, 0], sizes = [8, 384], strides = [1, 1]} : vector<12x384xf32> to vector<8x384xf32>
    %cst_37 = arith.constant 0.233880743 : f32
    %120 = vector.broadcast %cst_37 : f32 to vector<8x384xf32>
    %121 = arith.mulf %120, %119 : vector<8x384xf32>
    %122 = arith.addf %118, %121 : vector<8x384xf32>
    %123 = vector.extract_strided_slice %107 {offsets = [4, 0], sizes = [8, 384], strides = [1, 1]} : vector<12x384xf32> to vector<8x384xf32>
    %cst_38 = arith.constant 0.120078377 : f32
    %124 = vector.broadcast %cst_38 : f32 to vector<8x384xf32>
    %125 = arith.mulf %124, %123 : vector<8x384xf32>
    %126 = arith.addf %122, %125 : vector<8x384xf32>
    %127 = arith.mulf %66, %66 : vector<8x384xf32>
    %128 = arith.subf %106, %127 : vector<8x384xf32>
    %cst_39 = arith.constant 9.99999993E-9 : f32
    %129 = vector.broadcast %cst_39 : f32 to vector<8x384xf32>
    %130 = arith.maximumf %128, %129 : vector<8x384xf32>
    %131 = arith.mulf %86, %86 : vector<8x384xf32>
    %132 = arith.subf %126, %131 : vector<8x384xf32>
    %cst_40 = arith.constant 9.99999993E-9 : f32
    %133 = vector.broadcast %cst_40 : f32 to vector<8x384xf32>
    %134 = arith.maximumf %132, %133 : vector<8x384xf32>
    %135 = arith.subf %66, %86 : vector<8x384xf32>
    %136 = vector.broadcast %5 : vector<1x384xf32> to vector<8x384xf32>
    %137 = arith.mulf %135, %136 : vector<8x384xf32>
    %138 = math.sqrt %130 : vector<8x384xf32>
    %139 = math.sqrt %134 : vector<8x384xf32>
    %140 = arith.subf %138, %139 : vector<8x384xf32>
    %141 = vector.broadcast %5 : vector<1x384xf32> to vector<8x384xf32>
    %142 = arith.mulf %140, %141 : vector<8x384xf32>
    %143 = arith.mulf %137, %137 : vector<8x384xf32>
    %144 = vector.shape_cast %143 : vector<8x384xf32> to vector<1x8x384xf32>
    %cst_41 = arith.constant dense<0.000000e+00> : vector<1xf32>
    %145 = vector.multi_reduction <add>, %144, %cst_41 [1, 2] : vector<1x8x384xf32> to vector<1xf32>
    %146 = vector.shape_cast %145 : vector<1xf32> to vector<1x1x1xf32>
    %147 = vector.extract %146[0, 0, 0] : f32 from vector<1x1x1xf32>
    %148 = arith.mulf %142, %142 : vector<8x384xf32>
    %149 = vector.shape_cast %148 : vector<8x384xf32> to vector<1x8x384xf32>
    %cst_42 = arith.constant dense<0.000000e+00> : vector<1xf32>
    %150 = vector.multi_reduction <add>, %149, %cst_42 [1, 2] : vector<1x8x384xf32> to vector<1xf32>
    %151 = vector.shape_cast %150 : vector<1xf32> to vector<1x1x1xf32>
    %152 = vector.extract %151[0, 0, 0] : f32 from vector<1x1x1xf32>
    %153 = arith.subf %1, %3 : vector<12x512xf32>
    %154 = math.absf %153 : vector<12x512xf32>
    %155 = vector.shape_cast %154 : vector<12x512xf32> to vector<1x12x512xf32>
    %cst_43 = arith.constant dense<0.000000e+00> : vector<1xf32>
    %156 = vector.multi_reduction <add>, %155, %cst_43 [1, 2] : vector<1x12x512xf32> to vector<1xf32>
    %157 = vector.shape_cast %156 : vector<1xf32> to vector<1x1x1xf32>
    %158 = vector.extract %157[0, 0, 0] : f32 from vector<1x1x1xf32>
    %159 = vector.shape_cast %1 : vector<12x512xf32> to vector<1x12x512xf32>
    %cst_44 = arith.constant dense<0.000000e+00> : vector<1xf32>
    %160 = vector.multi_reduction <add>, %159, %cst_44 [1, 2] : vector<1x12x512xf32> to vector<1xf32>
    %161 = vector.shape_cast %160 : vector<1xf32> to vector<1x1x1xf32>
    %162 = vector.extract %161[0, 0, 0] : f32 from vector<1x1x1xf32>
    %cst_45 = arith.constant dense<0.000000e+00> : vector<512xf32>
    %163 = vector.multi_reduction <add>, %1, %cst_45 [0] : vector<12x512xf32> to vector<512xf32>
    %164 = vector.shape_cast %163 : vector<512xf32> to vector<1x512xf32>
    %cst_46 = arith.constant dense<0.000000e+00> : vector<512xf32>
    %165 = vector.multi_reduction <add>, %6, %cst_46 [0] : vector<12x512xf32> to vector<512xf32>
    %166 = vector.shape_cast %165 : vector<512xf32> to vector<1x512xf32>
    %cst_47 = arith.constant dense<0.000000e+00> : vector<512xf32>
    %167 = vector.multi_reduction <add>, %3, %cst_47 [0] : vector<12x512xf32> to vector<512xf32>
    %168 = vector.shape_cast %167 : vector<512xf32> to vector<1x512xf32>
    %cst_48 = arith.constant dense<0.000000e+00> : vector<512xf32>
    %169 = vector.multi_reduction <add>, %7, %cst_48 [0] : vector<12x512xf32> to vector<512xf32>
    %170 = vector.shape_cast %169 : vector<512xf32> to vector<1x512xf32>
    %171 = arith.mulf %164, %164 : vector<1x512xf32>
    %cst_49 = arith.constant 1.250000e-01 : f32
    %172 = vector.broadcast %cst_49 : f32 to vector<1x512xf32>
    %173 = arith.mulf %171, %172 : vector<1x512xf32>
    %174 = arith.subf %166, %173 : vector<1x512xf32>
    %cst_50 = arith.constant 0.000000e+00 : f32
    %175 = vector.broadcast %cst_50 : f32 to vector<1x512xf32>
    %176 = arith.maximumf %174, %175 : vector<1x512xf32>
    %cst_51 = arith.constant 0.142857149 : f32
    %177 = vector.broadcast %cst_51 : f32 to vector<1x512xf32>
    %178 = arith.mulf %176, %177 : vector<1x512xf32>
    %179 = arith.mulf %168, %168 : vector<1x512xf32>
    %cst_52 = arith.constant 1.250000e-01 : f32
    %180 = vector.broadcast %cst_52 : f32 to vector<1x512xf32>
    %181 = arith.mulf %179, %180 : vector<1x512xf32>
    %182 = arith.subf %170, %181 : vector<1x512xf32>
    %cst_53 = arith.constant 0.000000e+00 : f32
    %183 = vector.broadcast %cst_53 : f32 to vector<1x512xf32>
    %184 = arith.maximumf %182, %183 : vector<1x512xf32>
    %cst_54 = arith.constant 0.142857149 : f32
    %185 = vector.broadcast %cst_54 : f32 to vector<1x512xf32>
    %186 = arith.mulf %184, %185 : vector<1x512xf32>
    %187 = math.sqrt %178 : vector<1x512xf32>
    %188 = math.sqrt %186 : vector<1x512xf32>
    %189 = arith.subf %187, %188 : vector<1x512xf32>
    %190 = arith.mulf %189, %189 : vector<1x512xf32>
    %191 = vector.shape_cast %190 : vector<1x512xf32> to vector<1x1x512xf32>
    %cst_55 = arith.constant dense<0.000000e+00> : vector<1xf32>
    %192 = vector.multi_reduction <add>, %191, %cst_55 [1, 2] : vector<1x1x512xf32> to vector<1xf32>
    %193 = vector.shape_cast %192 : vector<1xf32> to vector<1x1x1xf32>
    %194 = vector.extract %193[0, 0, 0] : f32 from vector<1x1x1xf32>
    %195 = tpu.iota {dimensions = array<i32: 0>} : vector<8x128xi32>
    %cst_56 = arith.constant 0.000000e+00 : f32
    %196 = vector.broadcast %cst_56 : f32 to vector<8x128xf32>
    %c0_i32 = arith.constant 0 : i32
    %197 = vector.broadcast %c0_i32 : i32 to vector<8x128xi32>
    %198 = arith.cmpi eq, %195, %197 : vector<8x128xi32>
    %199 = vector.broadcast %147 : f32 to vector<8x128xf32>
    %200 = arith.select %198, %199, %196 : vector<8x128xi1>, vector<8x128xf32>
    %c1_i32 = arith.constant 1 : i32
    %201 = vector.broadcast %c1_i32 : i32 to vector<8x128xi32>
    %202 = arith.cmpi eq, %195, %201 : vector<8x128xi32>
    %203 = vector.broadcast %152 : f32 to vector<8x128xf32>
    %204 = arith.select %202, %203, %200 : vector<8x128xi1>, vector<8x128xf32>
    %c2_i32 = arith.constant 2 : i32
    %205 = vector.broadcast %c2_i32 : i32 to vector<8x128xi32>
    %206 = arith.cmpi eq, %195, %205 : vector<8x128xi32>
    %207 = vector.broadcast %158 : f32 to vector<8x128xf32>
    %208 = arith.select %206, %207, %204 : vector<8x128xi1>, vector<8x128xf32>
    %c3_i32 = arith.constant 3 : i32
    %209 = vector.broadcast %c3_i32 : i32 to vector<8x128xi32>
    %210 = arith.cmpi eq, %195, %209 : vector<8x128xi32>
    %211 = vector.broadcast %162 : f32 to vector<8x128xf32>
    %212 = arith.select %210, %211, %208 : vector<8x128xi1>, vector<8x128xf32>
    %c4_i32 = arith.constant 4 : i32
    %213 = vector.broadcast %c4_i32 : i32 to vector<8x128xi32>
    %214 = arith.cmpi eq, %195, %213 : vector<8x128xi32>
    %215 = vector.broadcast %194 : f32 to vector<8x128xf32>
    %216 = arith.select %214, %215, %212 : vector<8x128xi1>, vector<8x128xf32>
    %c0_57 = arith.constant 0 : index
    %c0_58 = arith.constant 0 : index
    %c0_59 = arith.constant 0 : index
    %c0_60 = arith.constant 0 : index
    %217 = vector.load %arg5[%c0_57, %c0_58, %c0_59, %c0_60] : memref<1x1x8x128xf32, #tpu.memory_space<vmem>>, vector<1x1x8x128xf32>
    %218 = vector.shape_cast %217 : vector<1x1x8x128xf32> to vector<8x128xf32>
    %219 = vector.shape_cast %216 : vector<8x128xf32> to vector<1x1x8x128xf32>
    tpu.vector_store %arg5[%c0_57, %c0_58, %c0_59, %c0_60], %219 {strides = array<i32>} : memref<1x1x8x128xf32, #tpu.memory_space<vmem>>, vector<1x1x8x128xf32>,
    return
  }
  func.func @transform_0(%arg0: i32, %arg1: i32) -> (i32, i32, i32) {
    %c0_i32 = arith.constant 0 : i32
    %c0_i32_0 = arith.constant 0 : i32
    %c0_i32_1 = arith.constant 0 : i32
    return %arg0, %c0_i32, %c0_i32_0 : i32, i32, i32
  }
  func.func @transform_1(%arg0: i32, %arg1: i32) -> (i32, i32, i32, i32) {
    %c0_i32 = arith.constant 0 : i32
    %c0_i32_0 = arith.constant 0 : i32
    %c0_i32_1 = arith.constant 0 : i32
    return %arg0, %arg1, %c0_i32, %c0_i32_0 : i32, i32, i32, i32
  }
  func.func @transform_2(%arg0: i32, %arg1: i32) -> (i32, i32, i32, i32) {
    %c0_i32 = arith.constant 0 : i32
    %c0_i32_0 = arith.constant 0 : i32
    %c0_i32_1 = arith.constant 0 : i32
    return %arg0, %arg1, %c0_i32, %c0_i32_0 : i32, i32, i32, i32
  }
  func.func @transform_3(%arg0: i32, %arg1: i32) -> (i32, i32, i32, i32) {
    %c0_i32 = arith.constant 0 : i32
    %c0_i32_0 = arith.constant 0 : i32
    %c0_i32_1 = arith.constant 0 : i32
    return %arg0, %arg1, %c0_i32, %c0_i32_0 : i32, i32, i32, i32
  }
}

</mosaic_0001>

<llo_original>
// kernel: tpu_custom_call.1
$region0: #{tpu_custom_call.1}
  #allocation0 [shape = 'u32[]', space=smem, size = 0x4, offset = 0x4, fixed_abs, tag = 'smem constant byte address 0x4 - core index']
  #allocation1 [shape = 'u32[144,128]{1,0:T(1,128)}', space=vmem, size = 0x12000, scoped, tag = 'internal scratch']
  %s0 = inlined_call_operand.vmem [shape: f32[2,1,384], index: 0, kind: input, shape index: {}]
  %s1 = inlined_call_operand.vmem [shape: f32[2,4,12,512], index: 1, kind: input, shape index: {}]
  %s2 = inlined_call_operand.vmem [shape: f32[2,4,12,512], index: 2, kind: input, shape index: {}]
  %s3 = inlined_call_operand.hbm [shape: f32[2,4,8,128], index: 3, kind: output, shape index: {}]
  %s4 = sld [smem:[#allocation0]]
  $region45: #{tpu_custom_call.1} parent=0
    _
  %s6 = ssub.s32 1, %s4
  %s7 = scalar_select 0, %s6, %s4
  $region1: #{tpu_custom_call.1} parent=0
    #allocation2 [shape = 'u8[8192]{0}', space=vmem, size = 0x2000, scoped, tag = 'output window, operand 0']
    #allocation3 [shape = 's32[2]{0}', space=sflag, size = 0x8, scoped, tag = 'scoped memory for tpu_custom_call.1']
    %8 = vsyncpa [#allocation3], 0
    %s9 = scalar_lea.sflag [#allocation3], 1
    %10 = vsyncpa %s9, 0
    loop: start=0, step=1, limit=10
    $region2: #{tpu_custom_call.1} parent=1 // loop_pre_header
      _
    $region3: #{tpu_custom_call.1} parent=1 // loop_header
      %s12 = sphi 0, %s16
      %p13 = scmp.ge.s32.totalorder %s12, 10
      %s19 = sphi 0, %s31
      %s20 = sphi 0, %s27
      %s21 = sphi 0, %s19
      %s22 = sphi 0, %s20
      %s23 = sphi 0, %s21
      %s24 = sphi 0, %s22
      %s34 = sphi 0, %s36
      %s37 = sphi 0, %s34
      %s38 = sphi 0, %s37
      %s54 = sphi 0, %s38
      %s62 = sphi 0, %s64
      %s65 = sphi 0, %s62
      %s66 = sphi 0, %s65
      %s82 = sphi 0, %s66
      %s90 = sphi 0, %s92
      %s93 = sphi 0, %s90
      %s94 = sphi 0, %s93
      %s110 = sphi 0, %s94
      %s118 = sphi 0, %s120
      %s121 = sphi 0, %s118
      %s122 = sphi 0, %s121
      %s138 = sphi 0, %s122
    $region4: #{tpu_custom_call.1} parent=1 // loop_header_branch
      %15 = sbr.rel (%p13) target = $region8
    $region5: #{tpu_custom_call.1} parent=1 // loop_body
      %s17 = ssub.s32 %s12, 1
      %s18 = ssub.s32 %s12, 2
      %s25 = sadd.s32 1, %s20
      %p26 = scmp.ge.s32.totalorder %s25, 4
      %s27 = scalar_select %p26, 0, %s25
      %s28 = sadd.s32 1, %s19
      %s29 = scalar_select %p26, %s28, %s19
      %p30 = scmp.ge.s32.totalorder %s29, 2
      %s31 = scalar_select %p30, 0, %s29
      %s32 = ssub.s32 %s19, %s31
      %p33 = scmp.eq.s32.totalorder %s32, 0
      %s35 = sadd.s32 %s34, 1
      %s36 = scalar_select %p33, %s34, %s35
      %p39 = pneg %p33
      %p40 = scmp.eq.s32.totalorder %s12, 7
      %p41 = por %p39, %p40
      %p42 = scmp.ne.s32.totalorder %s34, %s37
      %p43 = scmp.eq.s32.totalorder %s12, 0
      %p44 = por %p42, %p43
      %p45 = scmp.ne.s32.totalorder %s34, %s37
      %p46 = scmp.eq.s32.totalorder %s17, 7
      %p47 = por %p45, %p46
      %p48 = scmp.ne.s32.totalorder %s37, %s38
      %p49 = scmp.eq.s32.totalorder %s17, 0
      %p50 = por %p48, %p49
      %p51 = scmp.ne.s32.totalorder %s37, %s38
      %p52 = scmp.eq.s32.totalorder %s18, 7
      %p53 = por %p51, %p52
      %p55 = scmp.ne.s32.totalorder %s38, %s54
      %p56 = scmp.eq.s32.totalorder %s18, 0
      %p57 = por %p55, %p56
      %s58 = ssub.s32 %s19, %s31
      %s59 = ssub.s32 %s20, %s27
      %s60 = sor.u32 %s58, %s59
      %p61 = scmp.eq.s32.totalorder %s60, 0
      %s63 = sadd.s32 %s62, 1
      %s64 = scalar_select %p61, %s62, %s63
      %p67 = pneg %p61
      %p68 = scmp.eq.s32.totalorder %s12, 7
      %p69 = por %p67, %p68
      %p70 = scmp.ne.s32.totalorder %s62, %s65
      %p71 = scmp.eq.s32.totalorder %s12, 0
      %p72 = por %p70, %p71
      %p73 = scmp.ne.s32.totalorder %s62, %s65
      %p74 = scmp.eq.s32.totalorder %s17, 7
      %p75 = por %p73, %p74
      %p76 = scmp.ne.s32.totalorder %s65, %s66
      %p77 = scmp.eq.s32.totalorder %s17, 0
      %p78 = por %p76, %p77
      %p79 = scmp.ne.s32.totalorder %s65, %s66
      %p80 = scmp.eq.s32.totalorder %s18, 7
      %p81 = por %p79, %p80
      %p83 = scmp.ne.s32.totalorder %s66, %s82
      %p84 = scmp.eq.s32.totalorder %s18, 0
      %p85 = por %p83, %p84
      %s86 = ssub.s32 %s19, %s31
      %s87 = ssub.s32 %s20, %s27
      %s88 = sor.u32 %s86, %s87
      %p89 = scmp.eq.s32.totalorder %s88, 0
      %s91 = sadd.s32 %s90, 1
      %s92 = scalar_select %p89, %s90, %s91
      %p95 = pneg %p89
      %p96 = scmp.eq.s32.totalorder %s12, 7
      %p97 = por %p95, %p96
      %p98 = scmp.ne.s32.totalorder %s90, %s93
      %p99 = scmp.eq.s32.totalorder %s12, 0
      %p100 = por %p98, %p99
      %p101 = scmp.ne.s32.totalorder %s90, %s93
      %p102 = scmp.eq.s32.totalorder %s17, 7
      %p103 = por %p101, %p102
      %p104 = scmp.ne.s32.totalorder %s93, %s94
      %p105 = scmp.eq.s32.totalorder %s17, 0
      %p106 = por %p104, %p105
      %p107 = scmp.ne.s32.totalorder %s93, %s94
      %p108 = scmp.eq.s32.totalorder %s18, 7
      %p109 = por %p107, %p108
      %p111 = scmp.ne.s32.totalorder %s94, %s110
      %p112 = scmp.eq.s32.totalorder %s18, 0
      %p113 = por %p111, %p112
      %s114 = ssub.s32 %s19, %s31
      %s115 = ssub.s32 %s20, %s27
      %s116 = sor.u32 %s114, %s115
      %p117 = scmp.eq.s32.totalorder %s116, 0
      %s119 = sadd.s32 %s118, 1
      %s120 = scalar_select %p117, %s118, %s119
      %p123 = pneg %p117
      %p124 = scmp.eq.s32.totalorder %s12, 7
      %p125 = por %p123, %p124
      %p126 = scmp.ne.s32.totalorder %s118, %s121
      %p127 = scmp.eq.s32.totalorder %s12, 0
      %p128 = por %p126, %p127
      %p129 = scmp.ne.s32.totalorder %s118, %s121
      %p130 = scmp.eq.s32.totalorder %s17, 7
      %p131 = por %p129, %p130
      %p132 = scmp.ne.s32.totalorder %s121, %s122
      %p133 = scmp.eq.s32.totalorder %s17, 0
      %p134 = por %p132, %p133
      %p135 = scmp.ne.s32.totalorder %s121, %s122
      %p136 = scmp.eq.s32.totalorder %s18, 7
      %p137 = por %p135, %p136
      %p139 = scmp.ne.s32.totalorder %s122, %s138
      %p140 = scmp.eq.s32.totalorder %s18, 0
      %p141 = por %p139, %p140
      %p142 = scmp.le.s32.totalorder 1, %s12
      %p143 = scmp.lt.s32.totalorder %s12, 9
      %p144 = pnand %p142, %p143
      %p145 = pneg %p144
      // Predicated region
      $region9: #{tpu_custom_call.1} parent=5 // pred_check
        _
      $region10: #{tpu_custom_call.1} parent=5 // pred_check_branch
        %147 = sbr.rel (%p144) target = $region12
      $region11: #{tpu_custom_call.1} parent=5 // pred_region
        %s148 = ssub.s32 %s12, 1
      $region12: #{tpu_custom_call.1} parent=5 // pred_fallthru
        _
      %p149 = scmp.lt.s32.totalorder %s12, 8
      // Predicated region
      $region13: #{tpu_custom_call.1} parent=5 // pred_check
        %p150 = pneg %p149
      $region14: #{tpu_custom_call.1} parent=5 // pred_check_branch
        %152 = sbr.rel (%p150) target = $region16
      $region15: #{tpu_custom_call.1} parent=5 // pred_region
        // Predicated region
        $region17: #{tpu_custom_call.1} parent=15 // pred_check
          %p153 = pneg %p44
        $region18: #{tpu_custom_call.1} parent=15 // pred_check_branch
          %155 = sbr.rel (%p153) target = $region20
        $region19: #{tpu_custom_call.1} parent=15 // pred_region
          %p156 = scmp.lt.s32.totalorder %s19, 1
          %s157 = scalar_select %p156, %s19, 1
          %s158 = smul.addr %s157, 3
          %s159 = scalar_lea.vmem %s0, %s158
        $region20: #{tpu_custom_call.1} parent=15 // pred_fallthru
          _
        // Predicated region
        $region21: #{tpu_custom_call.1} parent=15 // pred_check
          %p160 = pneg %p72
        $region22: #{tpu_custom_call.1} parent=15 // pred_check_branch
          %162 = sbr.rel (%p160) target = $region24
        $region23: #{tpu_custom_call.1} parent=15 // pred_region
          %p163 = scmp.lt.s32.totalorder %s19, 1
          %s164 = scalar_select %p163, %s19, 1
          %p165 = scmp.lt.s32.totalorder %s20, 3
          %s166 = scalar_select %p165, %s20, 3
          %s167 = smul.addr %s166, 8
          %s168 = smul.addr %s164, 32
          %s169 = sadd.s32 %s167, %s168
          %s170 = smul.addr %s169, 8
          %s171 = scalar_lea.vmem %s1, %s170
        $region24: #{tpu_custom_call.1} parent=15 // pred_fallthru
          _
        // Predicated region
        $region25: #{tpu_custom_call.1} parent=15 // pred_check
          %p172 = pneg %p100
        $region26: #{tpu_custom_call.1} parent=15 // pred_check_branch
          %174 = sbr.rel (%p172) target = $region28
        $region27: #{tpu_custom_call.1} parent=15 // pred_region
          %p175 = scmp.lt.s32.totalorder %s19, 1
          %s176 = scalar_select %p175, %s19, 1
          %p177 = scmp.lt.s32.totalorder %s20, 3
          %s178 = scalar_select %p177, %s20, 3
          %s179 = smul.addr %s178, 8
          %s180 = smul.addr %s176, 32
          %s181 = sadd.s32 %s179, %s180
          %s182 = smul.addr %s181, 8
          %s183 = scalar_lea.vmem %s2, %s182
        $region28: #{tpu_custom_call.1} parent=15 // pred_fallthru
          _
      $region16: #{tpu_custom_call.1} parent=5 // pred_fallthru
        _
      %p184 = scmp.le.s32.totalorder 1, %s12
      %p185 = scmp.lt.s32.totalorder %s12, 9
      %p186 = pnand %p184, %p185
      %p187 = pneg %p186
      // Predicated region
      $region29: #{tpu_custom_call.1} parent=5 // pred_check
        _
      $region30: #{tpu_custom_call.1} parent=5 // pred_check_branch
        %189 = sbr.rel (%p186) target = $region32
      $region31: #{tpu_custom_call.1} parent=5 // pred_region
        %s190 = ssub.s32 %s12, 1
        %p191 = scmp.lt.s32.totalorder %s21, 1
        %s192 = scalar_select %p191, %s21, 1
        %s193 = smul.addr %s192, 3
        %s194 = scalar_lea.vmem %s0, %s193
        %p195 = pneg %p50
        %p196 = pneg %p47
        %p197 = scmp.lt.s32.totalorder %s21, 1
        %s198 = scalar_select %p197, %s21, 1
        %p199 = scmp.lt.s32.totalorder %s22, 3
        %s200 = scalar_select %p199, %s22, 3
        %s201 = smul.addr %s200, 8
        %s202 = smul.addr %s198, 32
        %s203 = sadd.s32 %s201, %s202
        %s204 = smul.addr %s203, 8
        %s205 = scalar_lea.vmem %s1, %s204
        %p206 = pneg %p78
        %p207 = pneg %p75
        %p208 = scmp.lt.s32.totalorder %s21, 1
        %s209 = scalar_select %p208, %s21, 1
        %p210 = scmp.lt.s32.totalorder %s22, 3
        %s211 = scalar_select %p210, %s22, 3
        %s212 = smul.addr %s211, 8
        %s213 = smul.addr %s209, 32
        %s214 = sadd.s32 %s212, %s213
        %s215 = smul.addr %s214, 8
        %s216 = scalar_lea.vmem %s2, %s215
        %p217 = pneg %p106
        %p218 = pneg %p103
        %p219 = pneg %p134
        %p220 = pneg %p131
        %s221 = sand.u32 %s121, 1
        %s222 = scalar_lea.sflag [#allocation3], %s221
        %s223 = sand.u32 %s121, 1
        %s224 = smul.addr %s223, 8
        %s225 = scalar_lea.vmem [#allocation2], %s224
        %p226 = scmp.lt.s32.totalorder %s21, 1
        %s227 = scalar_select %p226, %s21, 1
        %s228 = smul.addr %s227, 3
        %s229 = scalar_lea.vmem %s0, %s228
        %p230 = scmp.lt.s32.totalorder %s21, 1
        %s231 = scalar_select %p230, %s21, 1
        %p232 = scmp.lt.s32.totalorder %s22, 3
        %s233 = scalar_select %p232, %s22, 3
        %s234 = smul.addr %s233, 8
        %s235 = smul.addr %s231, 32
        %s236 = sadd.s32 %s234, %s235
        %s237 = smul.addr %s236, 8
        %s238 = scalar_lea.vmem %s1, %s237
        %p239 = scmp.lt.s32.totalorder %s21, 1
        %s240 = scalar_select %p239, %s21, 1
        %p241 = scmp.lt.s32.totalorder %s22, 3
        %s242 = scalar_select %p241, %s22, 3
        %s243 = smul.addr %s242, 8
        %s244 = smul.addr %s240, 32
        %s245 = sadd.s32 %s243, %s244
        %s246 = smul.addr %s245, 8
        %s247 = scalar_lea.vmem %s2, %s246
        %v248 = vld [vmem:[%s238] sm:$0xff]
        %v249 = vld [vmem:[%s238 + $0x8] sm:$0xff]
        %v250 = vld [vmem:[%s238 + $0x10] sm:$0xff]
        %v251 = vld [vmem:[%s238 + $0x18] sm:$0xff]
        %v252 = vld [vmem:[%s238 + $0x20] sm:$0xf]
        %v253 = vld [vmem:[%s238 + $0x28] sm:$0xf]
        %v254 = vld [vmem:[%s238 + $0x30] sm:$0xf]
        %v255 = vld [vmem:[%s238 + $0x38] sm:$0xf]
        %v256 = vld [vmem:[%s247] sm:$0xff]
        %v257 = vld [vmem:[%s247 + $0x8] sm:$0xff]
        %v258 = vld [vmem:[%s247 + $0x10] sm:$0xff]
        %v259 = vld [vmem:[%s247 + $0x18] sm:$0xff]
        %v260 = vld [vmem:[%s247 + $0x20] sm:$0xf]
        %v261 = vld [vmem:[%s247 + $0x28] sm:$0xf]
        %v262 = vld [vmem:[%s247 + $0x30] sm:$0xf]
        %v263 = vld [vmem:[%s247 + $0x38] sm:$0xf]
        %v264 = vld [vmem:[%s229] sm:$0x7]
        %v265 = vmul.f32 %v248, %v248
        %v266 = vmul.f32 %v249, %v249
        %v267 = vmul.f32 %v250, %v250
        %v268 = vmul.f32 %v251, %v251
        %v269 = vmul.f32 %v252, %v252
        %v270 = vmul.f32 %v253, %v253
        %v271 = vmul.f32 %v254, %v254
        %v272 = vmul.f32 %v255, %v255
        %v273 = vmul.f32 %v256, %v256
        %v274 = vmul.f32 %v257, %v257
        %v275 = vmul.f32 %v258, %v258
        %v276 = vmul.f32 %v259, %v259
        %v277 = vmul.f32 %v260, %v260
        %v278 = vmul.f32 %v261, %v261
        %v279 = vmul.f32 %v262, %v262
        %v280 = vmul.f32 %v263, %v263
        %vm289 = vcmask 1043456
        %v290 = vrot.slane %v256, 4
        %v291 = vrot.slane %v257, 4
        %v292 = vrot.slane %v258, 4
        %v293 = vrot.slane %v259, 4
        %v294 = vrot.slane %v260, 4
        %v295 = vsel %vm289, %v290, %v294
        %v296 = vrot.slane %v261, 4
        %v297 = vsel %vm289, %v291, %v296
        %v298 = vrot.slane %v262, 4
        %v299 = vsel %vm289, %v292, %v298
        %v300 = vrot.slane %v263, 4
        %v301 = vsel %vm289, %v293, %v300
        %v318 = vrot.slane %v273, 4
        %v319 = vrot.slane %v274, 4
        %v320 = vrot.slane %v275, 4
        %v321 = vrot.slane %v276, 4
        %v322 = vrot.slane %v277, 4
        %v323 = vsel %vm289, %v318, %v322
        %v324 = vrot.slane %v278, 4
        %v325 = vsel %vm289, %v319, %v324
        %v326 = vrot.slane %v279, 4
        %v327 = vsel %vm289, %v320, %v326
        %v328 = vrot.slane %v280, 4
        %v329 = vsel %vm289, %v321, %v328
        %v338 = vsel %vm289, %v252, %v290
        %v339 = vsel %vm289, %v253, %v291
        %v340 = vsel %vm289, %v254, %v292
        %v341 = vsel %vm289, %v255, %v293
        %v342 = vsel %vm289, %v269, %v318
        %v343 = vsel %vm289, %v270, %v319
        %v344 = vsel %vm289, %v271, %v320
        %v345 = vsel %vm289, %v272, %v321
        %v346 = vmul.f32 %v248, 0.12007838
        %v347 = vmul.f32 %v249, 0.12007838
        %v348 = vmul.f32 %v250, 0.12007838
        %v349 = vmul.f32 %v251, 0.12007838
        %v350 = vmul.f32 %v338, 0.12007838
        %v351 = vmul.f32 %v339, 0.12007838
        %v352 = vmul.f32 %v340, 0.12007838
        %v353 = vmul.f32 %v341, 0.12007838
        %v354 = vmul.f32 %v295, 0.12007838
        %v355 = vmul.f32 %v297, 0.12007838
        %v356 = vmul.f32 %v299, 0.12007838
        %v357 = vmul.f32 %v301, 0.12007838
        %v358 = vmul.f32 %v265, 0.12007838
        %v359 = vmul.f32 %v266, 0.12007838
        %v360 = vmul.f32 %v267, 0.12007838
        %v361 = vmul.f32 %v268, 0.12007838
        %v362 = vmul.f32 %v342, 0.12007838
        %v363 = vmul.f32 %v343, 0.12007838
        %v364 = vmul.f32 %v344, 0.12007838
        %v365 = vmul.f32 %v345, 0.12007838
        %v366 = vmul.f32 %v323, 0.12007838
        %v367 = vmul.f32 %v325, 0.12007838
        %v368 = vmul.f32 %v327, 0.12007838
        %v369 = vmul.f32 %v329, 0.12007838
        %v370 = vmul.f32 %v248, 0.23388074
        %v371 = vmul.f32 %v249, 0.23388074
        %v372 = vmul.f32 %v250, 0.23388074
        %v373 = vmul.f32 %v251, 0.23388074
        %v374 = vmul.f32 %v338, 0.23388074
        %v375 = vmul.f32 %v339, 0.23388074
        %v376 = vmul.f32 %v340, 0.23388074
        %v377 = vmul.f32 %v341, 0.23388074
        %v378 = vmul.f32 %v295, 0.23388074
        %v379 = vmul.f32 %v297, 0.23388074
        %v380 = vmul.f32 %v299, 0.23388074
        %v381 = vmul.f32 %v301, 0.23388074
        %v382 = vmul.f32 %v265, 0.23388074
        %v383 = vmul.f32 %v266, 0.23388074
        %v384 = vmul.f32 %v267, 0.23388074
        %v385 = vmul.f32 %v268, 0.23388074
        %v386 = vmul.f32 %v342, 0.23388074
        %v387 = vmul.f32 %v343, 0.23388074
        %v388 = vmul.f32 %v344, 0.23388074
        %v389 = vmul.f32 %v345, 0.23388074
        %v390 = vmul.f32 %v323, 0.23388074
        %v391 = vmul.f32 %v325, 0.23388074
        %v392 = vmul.f32 %v327, 0.23388074
        %v393 = vmul.f32 %v329, 0.23388074
        %418 = vrot.lane.b32.xlu0 %v370, 127
        %v419 = vpop.permute.xlu0 %418
        %420 = vrot.lane.b32.xlu0 %v371, 127
        %v421 = vpop.permute.xlu0 %420
        %422 = vrot.lane.b32.xlu0 %v372, 127
        %v423 = vpop.permute.xlu0 %422
        %424 = vrot.lane.b32.xlu0 %v373, 127
        %v425 = vpop.permute.xlu0 %424
        %426 = vrot.lane.b32.xlu0 %v374, 127
        %v427 = vpop.permute.xlu0 %426
        %428 = vrot.lane.b32.xlu0 %v375, 127
        %v429 = vpop.permute.xlu0 %428
        %430 = vrot.lane.b32.xlu0 %v376, 127
        %v431 = vpop.permute.xlu0 %430
        %432 = vrot.lane.b32.xlu0 %v377, 127
        %v433 = vpop.permute.xlu0 %432
        %434 = vrot.lane.b32.xlu0 %v378, 127
        %v435 = vpop.permute.xlu0 %434
        %436 = vrot.lane.b32.xlu0 %v379, 127
        %v437 = vpop.permute.xlu0 %436
        %438 = vrot.lane.b32.xlu0 %v380, 127
        %v439 = vpop.permute.xlu0 %438
        %440 = vrot.lane.b32.xlu0 %v381, 127
        %v441 = vpop.permute.xlu0 %440
        %442 = vrot.lane.b32.xlu0 %v382, 127
        %v443 = vpop.permute.xlu0 %442
        %444 = vrot.lane.b32.xlu0 %v383, 127
        %v445 = vpop.permute.xlu0 %444
        %446 = vrot.lane.b32.xlu0 %v384, 127
        %v447 = vpop.permute.xlu0 %446
        %448 = vrot.lane.b32.xlu0 %v385, 127
        %v449 = vpop.permute.xlu0 %448
        %450 = vrot.lane.b32.xlu0 %v386, 127
        %v451 = vpop.permute.xlu0 %450
        %452 = vrot.lane.b32.xlu0 %v387, 127
        %v453 = vpop.permute.xlu0 %452
        %454 = vrot.lane.b32.xlu0 %v388, 127
        %v455 = vpop.permute.xlu0 %454
        %456 = vrot.lane.b32.xlu0 %v389, 127
        %v457 = vpop.permute.xlu0 %456
        %458 = vrot.lane.b32.xlu0 %v390, 127
        %v459 = vpop.permute.xlu0 %458
        %460 = vrot.lane.b32.xlu0 %v391, 127
        %v461 = vpop.permute.xlu0 %460
        %462 = vrot.lane.b32.xlu0 %v392, 127
        %v463 = vpop.permute.xlu0 %462
        %464 = vrot.lane.b32.xlu0 %v393, 127
        %v465 = vpop.permute.xlu0 %464
        %vm466 = vcmask 1039360
        %v467 = vsel %vm466, %v419, %v421
        %v468 = vsel %vm466, %v421, %v423
        %v469 = vsel %vm466, %v423, %v425
        %v470 = vsel %vm466, %v427, %v429
        %v471 = vsel %vm466, %v429, %v431
        %v472 = vsel %vm466, %v431, %v433
        %v473 = vsel %vm466, %v435, %v437
        %v474 = vsel %vm466, %v437, %v439
        %v475 = vsel %vm466, %v439, %v441
        %v476 = vsel %vm466, %v443, %v445
        %v477 = vsel %vm466, %v445, %v447
        %v478 = vsel %vm466, %v447, %v449
        %v479 = vsel %vm466, %v451, %v453
        %v480 = vsel %vm466, %v453, %v455
        %v481 = vsel %vm466, %v455, %v457
        %v482 = vsel %vm466, %v459, %v461
        %v483 = vsel %vm466, %v461, %v463
        %v484 = vsel %vm466, %v463, %v465
        %v509 = vadd.f32 %v346, %v467
        %v510 = vadd.f32 %v347, %v468
        %v511 = vadd.f32 %v348, %v469
        %v512 = vadd.f32 %v349, %v425
        %v513 = vadd.f32 %v350, %v470
        %v514 = vadd.f32 %v351, %v471
        %v515 = vadd.f32 %v352, %v472
        %v516 = vadd.f32 %v353, %v433
        %v517 = vadd.f32 %v354, %v473
        %v518 = vadd.f32 %v355, %v474
        %v519 = vadd.f32 %v356, %v475
        %v520 = vadd.f32 %v357, %v441
        %v521 = vadd.f32 %v358, %v476
        %v522 = vadd.f32 %v359, %v477
        %v523 = vadd.f32 %v360, %v478
        %v524 = vadd.f32 %v361, %v449
        %v525 = vadd.f32 %v362, %v479
        %v526 = vadd.f32 %v363, %v480
        %v527 = vadd.f32 %v364, %v481
        %v528 = vadd.f32 %v365, %v457
        %v529 = vadd.f32 %v366, %v482
        %v530 = vadd.f32 %v367, %v483
        %v531 = vadd.f32 %v368, %v484
        %v532 = vadd.f32 %v369, %v465
        %v533 = vmul.f32 %v248, 0.2920817
        %v534 = vmul.f32 %v249, 0.2920817
        %v535 = vmul.f32 %v250, 0.2920817
        %v536 = vmul.f32 %v251, 0.2920817
        %v537 = vmul.f32 %v338, 0.2920817
        %v538 = vmul.f32 %v339, 0.2920817
        %v539 = vmul.f32 %v340, 0.2920817
        %v540 = vmul.f32 %v341, 0.2920817
        %v541 = vmul.f32 %v295, 0.2920817
        %v542 = vmul.f32 %v297, 0.2920817
        %v543 = vmul.f32 %v299, 0.2920817
        %v544 = vmul.f32 %v301, 0.2920817
        %v545 = vmul.f32 %v265, 0.2920817
        %v546 = vmul.f32 %v266, 0.2920817
        %v547 = vmul.f32 %v267, 0.2920817
        %v548 = vmul.f32 %v268, 0.2920817
        %v549 = vmul.f32 %v342, 0.2920817
        %v550 = vmul.f32 %v343, 0.2920817
        %v551 = vmul.f32 %v344, 0.2920817
        %v552 = vmul.f32 %v345, 0.2920817
        %v553 = vmul.f32 %v323, 0.2920817
        %v554 = vmul.f32 %v325, 0.2920817
        %v555 = vmul.f32 %v327, 0.2920817
        %v556 = vmul.f32 %v329, 0.2920817
        %581 = vrot.lane.b32.xlu0 %v533, 126
        %v582 = vpop.permute.xlu0 %581
        %583 = vrot.lane.b32.xlu0 %v534, 126
        %v584 = vpop.permute.xlu0 %583
        %585 = vrot.lane.b32.xlu0 %v535, 126
        %v586 = vpop.permute.xlu0 %585
        %587 = vrot.lane.b32.xlu0 %v536, 126
        %v588 = vpop.permute.xlu0 %587
        %589 = vrot.lane.b32.xlu0 %v537, 126
        %v590 = vpop.permute.xlu0 %589
        %591 = vrot.lane.b32.xlu0 %v538, 126
        %v592 = vpop.permute.xlu0 %591
        %593 = vrot.lane.b32.xlu0 %v539, 126
        %v594 = vpop.permute.xlu0 %593
        %595 = vrot.lane.b32.xlu0 %v540, 126
        %v596 = vpop.permute.xlu0 %595
        %597 = vrot.lane.b32.xlu0 %v541, 126
        %v598 = vpop.permute.xlu0 %597
        %599 = vrot.lane.b32.xlu0 %v542, 126
        %v600 = vpop.permute.xlu0 %599
        %601 = vrot.lane.b32.xlu0 %v543, 126
        %v602 = vpop.permute.xlu0 %601
        %603 = vrot.lane.b32.xlu0 %v544, 126
        %v604 = vpop.permute.xlu0 %603
        %605 = vrot.lane.b32.xlu0 %v545, 126
        %v606 = vpop.permute.xlu0 %605
        %607 = vrot.lane.b32.xlu0 %v546, 126
        %v608 = vpop.permute.xlu0 %607
        %609 = vrot.lane.b32.xlu0 %v547, 126
        %v610 = vpop.permute.xlu0 %609
        %611 = vrot.lane.b32.xlu0 %v548, 126
        %v612 = vpop.permute.xlu0 %611
        %613 = vrot.lane.b32.xlu0 %v549, 126
        %v614 = vpop.permute.xlu0 %613
        %615 = vrot.lane.b32.xlu0 %v550, 126
        %v616 = vpop.permute.xlu0 %615
        %617 = vrot.lane.b32.xlu0 %v551, 126
        %v618 = vpop.permute.xlu0 %617
        %619 = vrot.lane.b32.xlu0 %v552, 126
        %v620 = vpop.permute.xlu0 %619
        %621 = vrot.lane.b32.xlu0 %v553, 126
        %v622 = vpop.permute.xlu0 %621
        %623 = vrot.lane.b32.xlu0 %v554, 126
        %v624 = vpop.permute.xlu0 %623
        %625 = vrot.lane.b32.xlu0 %v555, 126
        %v626 = vpop.permute.xlu0 %625
        %627 = vrot.lane.b32.xlu0 %v556, 126
        %v628 = vpop.permute.xlu0 %627
        %vm629 = vcmask 1031168
        %v630 = vsel %vm629, %v582, %v584
        %v631 = vsel %vm629, %v584, %v586
        %v632 = vsel %vm629, %v586, %v588
        %v633 = vsel %vm629, %v590, %v592
        %v634 = vsel %vm629, %v592, %v594
        %v635 = vsel %vm629, %v594, %v596
        %v636 = vsel %vm629, %v598, %v600
        %v637 = vsel %vm629, %v600, %v602
        %v638 = vsel %vm629, %v602, %v604
        %v639 = vsel %vm629, %v606, %v608
        %v640 = vsel %vm629, %v608, %v610
        %v641 = vsel %vm629, %v610, %v612
        %v642 = vsel %vm629, %v614, %v616
        %v643 = vsel %vm629, %v616, %v618
        %v644 = vsel %vm629, %v618, %v620
        %v645 = vsel %vm629, %v622, %v624
        %v646 = vsel %vm629, %v624, %v626
        %v647 = vsel %vm629, %v626, %v628
        %v672 = vadd.f32 %v509, %v630
        %v673 = vadd.f32 %v510, %v631
        %v674 = vadd.f32 %v511, %v632
        %v675 = vadd.f32 %v512, %v588
        %v676 = vadd.f32 %v513, %v633
        %v677 = vadd.f32 %v514, %v634
        %v678 = vadd.f32 %v515, %v635
        %v679 = vadd.f32 %v516, %v596
        %v680 = vadd.f32 %v517, %v636
        %v681 = vadd.f32 %v518, %v637
        %v682 = vadd.f32 %v519, %v638
        %v683 = vadd.f32 %v520, %v604
        %v684 = vadd.f32 %v521, %v639
        %v685 = vadd.f32 %v522, %v640
        %v686 = vadd.f32 %v523, %v641
        %v687 = vadd.f32 %v524, %v612
        %v688 = vadd.f32 %v525, %v642
        %v689 = vadd.f32 %v526, %v643
        %v690 = vadd.f32 %v527, %v644
        %v691 = vadd.f32 %v528, %v620
        %v692 = vadd.f32 %v529, %v645
        %v693 = vadd.f32 %v530, %v646
        %v694 = vadd.f32 %v531, %v647
        %v695 = vadd.f32 %v532, %v628
        %696 = vrot.lane.b32.xlu0 %v370, 125
        %v697 = vpop.permute.xlu0 %696
        %698 = vrot.lane.b32.xlu0 %v371, 125
        %v699 = vpop.permute.xlu0 %698
        %700 = vrot.lane.b32.xlu0 %v372, 125
        %v701 = vpop.permute.xlu0 %700
        %702 = vrot.lane.b32.xlu0 %v373, 125
        %v703 = vpop.permute.xlu0 %702
        %704 = vrot.lane.b32.xlu0 %v374, 125
        %v705 = vpop.permute.xlu0 %704
        %706 = vrot.lane.b32.xlu0 %v375, 125
        %v707 = vpop.permute.xlu0 %706
        %708 = vrot.lane.b32.xlu0 %v376, 125
        %v709 = vpop.permute.xlu0 %708
        %710 = vrot.lane.b32.xlu0 %v377, 125
        %v711 = vpop.permute.xlu0 %710
        %712 = vrot.lane.b32.xlu0 %v378, 125
        %v713 = vpop.permute.xlu0 %712
        %714 = vrot.lane.b32.xlu0 %v379, 125
        %v715 = vpop.permute.xlu0 %714
        %716 = vrot.lane.b32.xlu0 %v380, 125
        %v717 = vpop.permute.xlu0 %716
        %718 = vrot.lane.b32.xlu0 %v381, 125
        %v719 = vpop.permute.xlu0 %718
        %720 = vrot.lane.b32.xlu0 %v382, 125
        %v721 = vpop.permute.xlu0 %720
        %722 = vrot.lane.b32.xlu0 %v383, 125
        %v723 = vpop.permute.xlu0 %722
        %724 = vrot.lane.b32.xlu0 %v384, 125
        %v725 = vpop.permute.xlu0 %724
        %726 = vrot.lane.b32.xlu0 %v385, 125
        %v727 = vpop.permute.xlu0 %726
        %728 = vrot.lane.b32.xlu0 %v386, 125
        %v729 = vpop.permute.xlu0 %728
        %730 = vrot.lane.b32.xlu0 %v387, 125
        %v731 = vpop.permute.xlu0 %730
        %732 = vrot.lane.b32.xlu0 %v388, 125
        %v733 = vpop.permute.xlu0 %732
        %734 = vrot.lane.b32.xlu0 %v389, 125
        %v735 = vpop.permute.xlu0 %734
        %736 = vrot.lane.b32.xlu0 %v390, 125
        %v737 = vpop.permute.xlu0 %736
        %738 = vrot.lane.b32.xlu0 %v391, 125
        %v739 = vpop.permute.xlu0 %738
        %740 = vrot.lane.b32.xlu0 %v392, 125
        %v741 = vpop.permute.xlu0 %740
        %742 = vrot.lane.b32.xlu0 %v393, 125
        %v743 = vpop.permute.xlu0 %742
        %vm744 = vcmask 1022976
        %v745 = vsel %vm744, %v697, %v699
        %v746 = vsel %vm744, %v699, %v701
        %v747 = vsel %vm744, %v701, %v703
        %v748 = vsel %vm744, %v705, %v707
        %v749 = vsel %vm744, %v707, %v709
        %v750 = vsel %vm744, %v709, %v711
        %v751 = vsel %vm744, %v713, %v715
        %v752 = vsel %vm744, %v715, %v717
        %v753 = vsel %vm744, %v717, %v719
        %v754 = vsel %vm744, %v721, %v723
        %v755 = vsel %vm744, %v723, %v725
        %v756 = vsel %vm744, %v725, %v727
        %v757 = vsel %vm744, %v729, %v731
        %v758 = vsel %vm744, %v731, %v733
        %v759 = vsel %vm744, %v733, %v735
        %v760 = vsel %vm744, %v737, %v739
        %v761 = vsel %vm744, %v739, %v741
        %v762 = vsel %vm744, %v741, %v743
        %v787 = vadd.f32 %v672, %v745
        %v788 = vadd.f32 %v673, %v746
        %v789 = vadd.f32 %v674, %v747
        %v790 = vadd.f32 %v675, %v703
        %v791 = vadd.f32 %v676, %v748
        %v792 = vadd.f32 %v677, %v749
        %v793 = vadd.f32 %v678, %v750
        %v794 = vadd.f32 %v679, %v711
        %v795 = vadd.f32 %v680, %v751
        %v796 = vadd.f32 %v681, %v752
        %v797 = vadd.f32 %v682, %v753
        %v798 = vadd.f32 %v683, %v719
        %v799 = vadd.f32 %v684, %v754
        %v800 = vadd.f32 %v685, %v755
        %v801 = vadd.f32 %v686, %v756
        %v802 = vadd.f32 %v687, %v727
        %v803 = vadd.f32 %v688, %v757
        %v804 = vadd.f32 %v689, %v758
        %v805 = vadd.f32 %v690, %v759
        %v806 = vadd.f32 %v691, %v735
        %v807 = vadd.f32 %v692, %v760
        %v808 = vadd.f32 %v693, %v761
        %v809 = vadd.f32 %v694, %v762
        %v810 = vadd.f32 %v695, %v743
        %835 = vrot.lane.b32.xlu0 %v346, 124
        %v836 = vpop.permute.xlu0 %835
        %837 = vrot.lane.b32.xlu0 %v347, 124
        %v838 = vpop.permute.xlu0 %837
        %839 = vrot.lane.b32.xlu0 %v348, 124
        %v840 = vpop.permute.xlu0 %839
        %841 = vrot.lane.b32.xlu0 %v349, 124
        %v842 = vpop.permute.xlu0 %841
        %843 = vrot.lane.b32.xlu0 %v350, 124
        %v844 = vpop.permute.xlu0 %843
        %845 = vrot.lane.b32.xlu0 %v351, 124
        %v846 = vpop.permute.xlu0 %845
        %847 = vrot.lane.b32.xlu0 %v352, 124
        %v848 = vpop.permute.xlu0 %847
        %849 = vrot.lane.b32.xlu0 %v353, 124
        %v850 = vpop.permute.xlu0 %849
        %851 = vrot.lane.b32.xlu0 %v354, 124
        %v852 = vpop.permute.xlu0 %851
        %853 = vrot.lane.b32.xlu0 %v355, 124
        %v854 = vpop.permute.xlu0 %853
        %855 = vrot.lane.b32.xlu0 %v356, 124
        %v856 = vpop.permute.xlu0 %855
        %857 = vrot.lane.b32.xlu0 %v357, 124
        %v858 = vpop.permute.xlu0 %857
        %859 = vrot.lane.b32.xlu0 %v358, 124
        %v860 = vpop.permute.xlu0 %859
        %861 = vrot.lane.b32.xlu0 %v359, 124
        %v862 = vpop.permute.xlu0 %861
        %863 = vrot.lane.b32.xlu0 %v360, 124
        %v864 = vpop.permute.xlu0 %863
        %865 = vrot.lane.b32.xlu0 %v361, 124
        %v866 = vpop.permute.xlu0 %865
        %867 = vrot.lane.b32.xlu0 %v362, 124
        %v868 = vpop.permute.xlu0 %867
        %869 = vrot.lane.b32.xlu0 %v363, 124
        %v870 = vpop.permute.xlu0 %869
        %871 = vrot.lane.b32.xlu0 %v364, 124
        %v872 = vpop.permute.xlu0 %871
        %873 = vrot.lane.b32.xlu0 %v365, 124
        %v874 = vpop.permute.xlu0 %873
        %875 = vrot.lane.b32.xlu0 %v366, 124
        %v876 = vpop.permute.xlu0 %875
        %877 = vrot.lane.b32.xlu0 %v367, 124
        %v878 = vpop.permute.xlu0 %877
        %879 = vrot.lane.b32.xlu0 %v368, 124
        %v880 = vpop.permute.xlu0 %879
        %881 = vrot.lane.b32.xlu0 %v369, 124
        %v882 = vpop.permute.xlu0 %881
        %vm883 = vcmask 1014784
        %v884 = vsel %vm883, %v836, %v838
        %v885 = vsel %vm883, %v838, %v840
        %v886 = vsel %vm883, %v840, %v842
        %v887 = vsel %vm883, %v844, %v846
        %v888 = vsel %vm883, %v846, %v848
        %v889 = vsel %vm883, %v848, %v850
        %v890 = vsel %vm883, %v852, %v854
        %v891 = vsel %vm883, %v854, %v856
        %v892 = vsel %vm883, %v856, %v858
        %v893 = vsel %vm883, %v860, %v862
        %v894 = vsel %vm883, %v862, %v864
        %v895 = vsel %vm883, %v864, %v866
        %v896 = vsel %vm883, %v868, %v870
        %v897 = vsel %vm883, %v870, %v872
        %v898 = vsel %vm883, %v872, %v874
        %v899 = vsel %vm883, %v876, %v878
        %v900 = vsel %vm883, %v878, %v880
        %v901 = vsel %vm883, %v880, %v882
        %v926 = vadd.f32 %v787, %v884
        %v927 = vadd.f32 %v788, %v885
        %v928 = vadd.f32 %v789, %v886
        %v929 = vadd.f32 %v790, %v842
        %v930 = vadd.f32 %v791, %v887
        %v931 = vadd.f32 %v792, %v888
        %v932 = vadd.f32 %v793, %v889
        %v933 = vadd.f32 %v794, %v850
        %v934 = vadd.f32 %v795, %v890
        %v935 = vadd.f32 %v796, %v891
        %v936 = vadd.f32 %v797, %v892
        %v937 = vadd.f32 %v798, %v858
        %v938 = vadd.f32 %v799, %v893
        %v939 = vadd.f32 %v800, %v894
        %v940 = vadd.f32 %v801, %v895
        %v941 = vadd.f32 %v802, %v866
        %v942 = vadd.f32 %v803, %v896
        %v943 = vadd.f32 %v804, %v897
        %v944 = vadd.f32 %v805, %v898
        %v945 = vadd.f32 %v806, %v874
        %v946 = vadd.f32 %v807, %v899
        %v947 = vadd.f32 %v808, %v900
        %v948 = vadd.f32 %v809, %v901
        %v949 = vadd.f32 %v810, %v882
        %v950 = vmul.f32 %v926, 0.12007838
        %v951 = vmul.f32 %v927, 0.12007838
        %v952 = vmul.f32 %v928, 0.12007838
        %v953 = vmul.f32 %v930, 0.12007838
        %v954 = vmul.f32 %v931, 0.12007838
        %v955 = vmul.f32 %v932, 0.12007838
        %v956 = vmul.f32 %v934, 0.12007838
        %v957 = vmul.f32 %v935, 0.12007838
        %v958 = vmul.f32 %v936, 0.12007838
        %v959 = vmul.f32 %v938, 0.12007838
        %v960 = vmul.f32 %v939, 0.12007838
        %v961 = vmul.f32 %v940, 0.12007838
        %v962 = vmul.f32 %v942, 0.12007838
        %v963 = vmul.f32 %v943, 0.12007838
        %v964 = vmul.f32 %v944, 0.12007838
        %v965 = vmul.f32 %v946, 0.12007838
        %v966 = vmul.f32 %v947, 0.12007838
        %v967 = vmul.f32 %v948, 0.12007838
        %v968 = vmul.f32 %v926, 0.23388074
        %v969 = vmul.f32 %v927, 0.23388074
        %v970 = vmul.f32 %v928, 0.23388074
        %v971 = vmul.f32 %v929, 0.23388074
        %v972 = vmul.f32 %v930, 0.23388074
        %v973 = vmul.f32 %v931, 0.23388074
        %v974 = vmul.f32 %v932, 0.23388074
        %v975 = vmul.f32 %v933, 0.23388074
        %v976 = vmul.f32 %v934, 0.23388074
        %v977 = vmul.f32 %v935, 0.23388074
        %v978 = vmul.f32 %v936, 0.23388074
        %v979 = vmul.f32 %v937, 0.23388074
        %v980 = vmul.f32 %v938, 0.23388074
        %v981 = vmul.f32 %v939, 0.23388074
        %v982 = vmul.f32 %v940, 0.23388074
        %v983 = vmul.f32 %v941, 0.23388074
        %v984 = vmul.f32 %v942, 0.23388074
        %v985 = vmul.f32 %v943, 0.23388074
        %v986 = vmul.f32 %v944, 0.23388074
        %v987 = vmul.f32 %v945, 0.23388074
        %v988 = vmul.f32 %v946, 0.23388074
        %v989 = vmul.f32 %v947, 0.23388074
        %v990 = vmul.f32 %v948, 0.23388074
        %v991 = vmul.f32 %v949, 0.23388074
        %1016 = vrot.lane.b32.xlu0 %v968, 104
        %v1017 = vpop.permute.xlu0 %1016
        %1018 = vrot.lane.b32.xlu0 %v969, 104
        %v1019 = vpop.permute.xlu0 %1018
        %1020 = vrot.lane.b32.xlu0 %v970, 104
        %v1021 = vpop.permute.xlu0 %1020
        %1022 = vrot.lane.b32.xlu0 %v971, 104
        %v1023 = vpop.permute.xlu0 %1022
        %1024 = vrot.lane.b32.xlu0 %v972, 104
        %v1025 = vpop.permute.xlu0 %1024
        %1026 = vrot.lane.b32.xlu0 %v973, 104
        %v1027 = vpop.permute.xlu0 %1026
        %1028 = vrot.lane.b32.xlu0 %v974, 104
        %v1029 = vpop.permute.xlu0 %1028
        %1030 = vrot.lane.b32.xlu0 %v975, 104
        %v1031 = vpop.permute.xlu0 %1030
        %1032 = vrot.lane.b32.xlu0 %v976, 104
        %v1033 = vpop.permute.xlu0 %1032
        %1034 = vrot.lane.b32.xlu0 %v977, 104
        %v1035 = vpop.permute.xlu0 %1034
        %1036 = vrot.lane.b32.xlu0 %v978, 104
        %v1037 = vpop.permute.xlu0 %1036
        %1038 = vrot.lane.b32.xlu0 %v979, 104
        %v1039 = vpop.permute.xlu0 %1038
        %1040 = vrot.lane.b32.xlu0 %v980, 104
        %v1041 = vpop.permute.xlu0 %1040
        %1042 = vrot.lane.b32.xlu0 %v981, 104
        %v1043 = vpop.permute.xlu0 %1042
        %1044 = vrot.lane.b32.xlu0 %v982, 104
        %v1045 = vpop.permute.xlu0 %1044
        %1046 = vrot.lane.b32.xlu0 %v983, 104
        %v1047 = vpop.permute.xlu0 %1046
        %1048 = vrot.lane.b32.xlu0 %v984, 104
        %v1049 = vpop.permute.xlu0 %1048
        %1050 = vrot.lane.b32.xlu0 %v985, 104
        %v1051 = vpop.permute.xlu0 %1050
        %1052 = vrot.lane.b32.xlu0 %v986, 104
        %v1053 = vpop.permute.xlu0 %1052
        %1054 = vrot.lane.b32.xlu0 %v987, 104
        %v1055 = vpop.permute.xlu0 %1054
        %1056 = vrot.lane.b32.xlu0 %v988, 104
        %v1057 = vpop.permute.xlu0 %1056
        %1058 = vrot.lane.b32.xlu0 %v989, 104
        %v1059 = vpop.permute.xlu0 %1058
        %1060 = vrot.lane.b32.xlu0 %v990, 104
        %v1061 = vpop.permute.xlu0 %1060
        %1062 = vrot.lane.b32.xlu0 %v991, 104
        %v1063 = vpop.permute.xlu0 %1062
        %vm1064 = vcmask 850944
        %v1065 = vsel %vm1064, %v1017, %v1019
        %v1066 = vsel %vm1064, %v1019, %v1021
        %v1067 = vsel %vm1064, %v1021, %v1023
        %v1068 = vsel %vm1064, %v1025, %v1027
        %v1069 = vsel %vm1064, %v1027, %v1029
        %v1070 = vsel %vm1064, %v1029, %v1031
        %v1071 = vsel %vm1064, %v1033, %v1035
        %v1072 = vsel %vm1064, %v1035, %v1037
        %v1073 = vsel %vm1064, %v1037, %v1039
        %v1074 = vsel %vm1064, %v1041, %v1043
        %v1075 = vsel %vm1064, %v1043, %v1045
        %v1076 = vsel %vm1064, %v1045, %v1047
        %v1077 = vsel %vm1064, %v1049, %v1051
        %v1078 = vsel %vm1064, %v1051, %v1053
        %v1079 = vsel %vm1064, %v1053, %v1055
        %v1080 = vsel %vm1064, %v1057, %v1059
        %v1081 = vsel %vm1064, %v1059, %v1061
        %v1082 = vsel %vm1064, %v1061, %v1063
        %v1101 = vadd.f32 %v950, %v1065
        %v1102 = vadd.f32 %v951, %v1066
        %v1103 = vadd.f32 %v952, %v1067
        %v1104 = vadd.f32 %v953, %v1068
        %v1105 = vadd.f32 %v954, %v1069
        %v1106 = vadd.f32 %v955, %v1070
        %v1107 = vadd.f32 %v956, %v1071
        %v1108 = vadd.f32 %v957, %v1072
        %v1109 = vadd.f32 %v958, %v1073
        %v1110 = vadd.f32 %v959, %v1074
        %v1111 = vadd.f32 %v960, %v1075
        %v1112 = vadd.f32 %v961, %v1076
        %v1113 = vadd.f32 %v962, %v1077
        %v1114 = vadd.f32 %v963, %v1078
        %v1115 = vadd.f32 %v964, %v1079
        %v1116 = vadd.f32 %v965, %v1080
        %v1117 = vadd.f32 %v966, %v1081
        %v1118 = vadd.f32 %v967, %v1082
        %v1119 = vmul.f32 %v926, 0.2920817
        %v1120 = vmul.f32 %v927, 0.2920817
        %v1121 = vmul.f32 %v928, 0.2920817
        %v1122 = vmul.f32 %v929, 0.2920817
        %v1123 = vmul.f32 %v930, 0.2920817
        %v1124 = vmul.f32 %v931, 0.2920817
        %v1125 = vmul.f32 %v932, 0.2920817
        %v1126 = vmul.f32 %v933, 0.2920817
        %v1127 = vmul.f32 %v934, 0.2920817
        %v1128 = vmul.f32 %v935, 0.2920817
        %v1129 = vmul.f32 %v936, 0.2920817
        %v1130 = vmul.f32 %v937, 0.2920817
        %v1131 = vmul.f32 %v938, 0.2920817
        %v1132 = vmul.f32 %v939, 0.2920817
        %v1133 = vmul.f32 %v940, 0.2920817
        %v1134 = vmul.f32 %v941, 0.2920817
        %v1135 = vmul.f32 %v942, 0.2920817
        %v1136 = vmul.f32 %v943, 0.2920817
        %v1137 = vmul.f32 %v944, 0.2920817
        %v1138 = vmul.f32 %v945, 0.2920817
        %v1139 = vmul.f32 %v946, 0.2920817
        %v1140 = vmul.f32 %v947, 0.2920817
        %v1141 = vmul.f32 %v948, 0.2920817
        %v1142 = vmul.f32 %v949, 0.2920817
        %1167 = vrot.lane.b32.xlu0 %v1119, 80
        %v1168 = vpop.permute.xlu0 %1167
        %1169 = vrot.lane.b32.xlu0 %v1120, 80
        %v1170 = vpop.permute.xlu0 %1169
        %1171 = vrot.lane.b32.xlu0 %v1121, 80
        %v1172 = vpop.permute.xlu0 %1171
        %1173 = vrot.lane.b32.xlu0 %v1122, 80
        %v1174 = vpop.permute.xlu0 %1173
        %1175 = vrot.lane.b32.xlu0 %v1123, 80
        %v1176 = vpop.permute.xlu0 %1175
        %1177 = vrot.lane.b32.xlu0 %v1124, 80
        %v1178 = vpop.permute.xlu0 %1177
        %1179 = vrot.lane.b32.xlu0 %v1125, 80
        %v1180 = vpop.permute.xlu0 %1179
        %1181 = vrot.lane.b32.xlu0 %v1126, 80
        %v1182 = vpop.permute.xlu0 %1181
        %1183 = vrot.lane.b32.xlu0 %v1127, 80
        %v1184 = vpop.permute.xlu0 %1183
        %1185 = vrot.lane.b32.xlu0 %v1128, 80
        %v1186 = vpop.permute.xlu0 %1185
        %1187 = vrot.lane.b32.xlu0 %v1129, 80
        %v1188 = vpop.permute.xlu0 %1187
        %1189 = vrot.lane.b32.xlu0 %v1130, 80
        %v1190 = vpop.permute.xlu0 %1189
        %1191 = vrot.lane.b32.xlu0 %v1131, 80
        %v1192 = vpop.permute.xlu0 %1191
        %1193 = vrot.lane.b32.xlu0 %v1132, 80
        %v1194 = vpop.permute.xlu0 %1193
        %1195 = vrot.lane.b32.xlu0 %v1133, 80
        %v1196 = vpop.permute.xlu0 %1195
        %1197 = vrot.lane.b32.xlu0 %v1134, 80
        %v1198 = vpop.permute.xlu0 %1197
        %1199 = vrot.lane.b32.xlu0 %v1135, 80
        %v1200 = vpop.permute.xlu0 %1199
        %1201 = vrot.lane.b32.xlu0 %v1136, 80
        %v1202 = vpop.permute.xlu0 %1201
        %1203 = vrot.lane.b32.xlu0 %v1137, 80
        %v1204 = vpop.permute.xlu0 %1203
        %1205 = vrot.lane.b32.xlu0 %v1138, 80
        %v1206 = vpop.permute.xlu0 %1205
        %1207 = vrot.lane.b32.xlu0 %v1139, 80
        %v1208 = vpop.permute.xlu0 %1207
        %1209 = vrot.lane.b32.xlu0 %v1140, 80
        %v1210 = vpop.permute.xlu0 %1209
        %1211 = vrot.lane.b32.xlu0 %v1141, 80
        %v1212 = vpop.permute.xlu0 %1211
        %1213 = vrot.lane.b32.xlu0 %v1142, 80
        %v1214 = vpop.permute.xlu0 %1213
        %vm1215 = vcmask 654336
        %v1216 = vsel %vm1215, %v1168, %v1170
        %v1217 = vsel %vm1215, %v1170, %v1172
        %v1218 = vsel %vm1215, %v1172, %v1174
        %v1219 = vsel %vm1215, %v1176, %v1178
        %v1220 = vsel %vm1215, %v1178, %v1180
        %v1221 = vsel %vm1215, %v1180, %v1182
        %v1222 = vsel %vm1215, %v1184, %v1186
        %v1223 = vsel %vm1215, %v1186, %v1188
        %v1224 = vsel %vm1215, %v1188, %v1190
        %v1225 = vsel %vm1215, %v1192, %v1194
        %v1226 = vsel %vm1215, %v1194, %v1196
        %v1227 = vsel %vm1215, %v1196, %v1198
        %v1228 = vsel %vm1215, %v1200, %v1202
        %v1229 = vsel %vm1215, %v1202, %v1204
        %v1230 = vsel %vm1215, %v1204, %v1206
        %v1231 = vsel %vm1215, %v1208, %v1210
        %v1232 = vsel %vm1215, %v1210, %v1212
        %v1233 = vsel %vm1215, %v1212, %v1214
        %v1252 = vadd.f32 %v1101, %v1216
        %v1253 = vadd.f32 %v1102, %v1217
        %v1254 = vadd.f32 %v1103, %v1218
        %v1255 = vadd.f32 %v1104, %v1219
        %v1256 = vadd.f32 %v1105, %v1220
        %v1257 = vadd.f32 %v1106, %v1221
        %v1258 = vadd.f32 %v1107, %v1222
        %v1259 = vadd.f32 %v1108, %v1223
        %v1260 = vadd.f32 %v1109, %v1224
        %v1261 = vadd.f32 %v1110, %v1225
        %v1262 = vadd.f32 %v1111, %v1226
        %v1263 = vadd.f32 %v1112, %v1227
        %v1264 = vadd.f32 %v1113, %v1228
        %v1265 = vadd.f32 %v1114, %v1229
        %v1266 = vadd.f32 %v1115, %v1230
        %v1267 = vadd.f32 %v1116, %v1231
        %v1268 = vadd.f32 %v1117, %v1232
        %v1269 = vadd.f32 %v1118, %v1233
        %1270 = vrot.lane.b32.xlu0 %v968, 56
        %v1271 = vpop.permute.xlu0 %1270
        %1272 = vrot.lane.b32.xlu0 %v969, 56
        %v1273 = vpop.permute.xlu0 %1272
        %1274 = vrot.lane.b32.xlu0 %v970, 56
        %v1275 = vpop.permute.xlu0 %1274
        %1276 = vrot.lane.b32.xlu0 %v971, 56
        %v1277 = vpop.permute.xlu0 %1276
        %1278 = vrot.lane.b32.xlu0 %v972, 56
        %v1279 = vpop.permute.xlu0 %1278
        %1280 = vrot.lane.b32.xlu0 %v973, 56
        %v1281 = vpop.permute.xlu0 %1280
        %1282 = vrot.lane.b32.xlu0 %v974, 56
        %v1283 = vpop.permute.xlu0 %1282
        %1284 = vrot.lane.b32.xlu0 %v975, 56
        %v1285 = vpop.permute.xlu0 %1284
        %1286 = vrot.lane.b32.xlu0 %v976, 56
        %v1287 = vpop.permute.xlu0 %1286
        %1288 = vrot.lane.b32.xlu0 %v977, 56
        %v1289 = vpop.permute.xlu0 %1288
        %1290 = vrot.lane.b32.xlu0 %v978, 56
        %v1291 = vpop.permute.xlu0 %1290
        %1292 = vrot.lane.b32.xlu0 %v979, 56
        %v1293 = vpop.permute.xlu0 %1292
        %1294 = vrot.lane.b32.xlu0 %v980, 56
        %v1295 = vpop.permute.xlu0 %1294
        %1296 = vrot.lane.b32.xlu0 %v981, 56
        %v1297 = vpop.permute.xlu0 %1296
        %1298 = vrot.lane.b32.xlu0 %v982, 56
        %v1299 = vpop.permute.xlu0 %1298
        %1300 = vrot.lane.b32.xlu0 %v983, 56
        %v1301 = vpop.permute.xlu0 %1300
        %1302 = vrot.lane.b32.xlu0 %v984, 56
        %v1303 = vpop.permute.xlu0 %1302
        %1304 = vrot.lane.b32.xlu0 %v985, 56
        %v1305 = vpop.permute.xlu0 %1304
        %1306 = vrot.lane.b32.xlu0 %v986, 56
        %v1307 = vpop.permute.xlu0 %1306
        %1308 = vrot.lane.b32.xlu0 %v987, 56
        %v1309 = vpop.permute.xlu0 %1308
        %1310 = vrot.lane.b32.xlu0 %v988, 56
        %v1311 = vpop.permute.xlu0 %1310
        %1312 = vrot.lane.b32.xlu0 %v989, 56
        %v1313 = vpop.permute.xlu0 %1312
        %1314 = vrot.lane.b32.xlu0 %v990, 56
        %v1315 = vpop.permute.xlu0 %1314
        %1316 = vrot.lane.b32.xlu0 %v991, 56
        %v1317 = vpop.permute.xlu0 %1316
        %vm1318 = vcmask 457728
        %v1319 = vsel %vm1318, %v1271, %v1273
        %v1320 = vsel %vm1318, %v1273, %v1275
        %v1321 = vsel %vm1318, %v1275, %v1277
        %v1322 = vsel %vm1318, %v1279, %v1281
        %v1323 = vsel %vm1318, %v1281, %v1283
        %v1324 = vsel %vm1318, %v1283, %v1285
        %v1325 = vsel %vm1318, %v1287, %v1289
        %v1326 = vsel %vm1318, %v1289, %v1291
        %v1327 = vsel %vm1318, %v1291, %v1293
        %v1328 = vsel %vm1318, %v1295, %v1297
        %v1329 = vsel %vm1318, %v1297, %v1299
        %v1330 = vsel %vm1318, %v1299, %v1301
        %v1331 = vsel %vm1318, %v1303, %v1305
        %v1332 = vsel %vm1318, %v1305, %v1307
        %v1333 = vsel %vm1318, %v1307, %v1309
        %v1334 = vsel %vm1318, %v1311, %v1313
        %v1335 = vsel %vm1318, %v1313, %v1315
        %v1336 = vsel %vm1318, %v1315, %v1317
        %v1355 = vadd.f32 %v1252, %v1319
        %v1356 = vadd.f32 %v1253, %v1320
        %v1357 = vadd.f32 %v1254, %v1321
        %v1358 = vadd.f32 %v1255, %v1322
        %v1359 = vadd.f32 %v1256, %v1323
        %v1360 = vadd.f32 %v1257, %v1324
        %v1361 = vadd.f32 %v1258, %v1325
        %v1362 = vadd.f32 %v1259, %v1326
        %v1363 = vadd.f32 %v1260, %v1327
        %v1364 = vadd.f32 %v1261, %v1328
        %v1365 = vadd.f32 %v1262, %v1329
        %v1366 = vadd.f32 %v1263, %v1330
        %v1367 = vadd.f32 %v1264, %v1331
        %v1368 = vadd.f32 %v1265, %v1332
        %v1369 = vadd.f32 %v1266, %v1333
        %v1370 = vadd.f32 %v1267, %v1334
        %v1371 = vadd.f32 %v1268, %v1335
        %v1372 = vadd.f32 %v1269, %v1336
        %v1373 = vmul.f32 %v929, 0.12007838
        %v1374 = vmul.f32 %v933, 0.12007838
        %v1375 = vmul.f32 %v937, 0.12007838
        %v1376 = vmul.f32 %v941, 0.12007838
        %v1377 = vmul.f32 %v945, 0.12007838
        %v1378 = vmul.f32 %v949, 0.12007838
        %1403 = vrot.lane.b32.xlu0 %v950, 32
        %v1404 = vpop.permute.xlu0 %1403
        %1405 = vrot.lane.b32.xlu0 %v951, 32
        %v1406 = vpop.permute.xlu0 %1405
        %1407 = vrot.lane.b32.xlu0 %v952, 32
        %v1408 = vpop.permute.xlu0 %1407
        %1409 = vrot.lane.b32.xlu0 %v1373, 32
        %v1410 = vpop.permute.xlu0 %1409
        %1411 = vrot.lane.b32.xlu0 %v953, 32
        %v1412 = vpop.permute.xlu0 %1411
        %1413 = vrot.lane.b32.xlu0 %v954, 32
        %v1414 = vpop.permute.xlu0 %1413
        %1415 = vrot.lane.b32.xlu0 %v955, 32
        %v1416 = vpop.permute.xlu0 %1415
        %1417 = vrot.lane.b32.xlu0 %v1374, 32
        %v1418 = vpop.permute.xlu0 %1417
        %1419 = vrot.lane.b32.xlu0 %v956, 32
        %v1420 = vpop.permute.xlu0 %1419
        %1421 = vrot.lane.b32.xlu0 %v957, 32
        %v1422 = vpop.permute.xlu0 %1421
        %1423 = vrot.lane.b32.xlu0 %v958, 32
        %v1424 = vpop.permute.xlu0 %1423
        %1425 = vrot.lane.b32.xlu0 %v1375, 32
        %v1426 = vpop.permute.xlu0 %1425
        %1427 = vrot.lane.b32.xlu0 %v959, 32
        %v1428 = vpop.permute.xlu0 %1427
        %1429 = vrot.lane.b32.xlu0 %v960, 32
        %v1430 = vpop.permute.xlu0 %1429
        %1431 = vrot.lane.b32.xlu0 %v961, 32
        %v1432 = vpop.permute.xlu0 %1431
        %1433 = vrot.lane.b32.xlu0 %v1376, 32
        %v1434 = vpop.permute.xlu0 %1433
        %1435 = vrot.lane.b32.xlu0 %v962, 32
        %v1436 = vpop.permute.xlu0 %1435
        %1437 = vrot.lane.b32.xlu0 %v963, 32
        %v1438 = vpop.permute.xlu0 %1437
        %1439 = vrot.lane.b32.xlu0 %v964, 32
        %v1440 = vpop.permute.xlu0 %1439
        %1441 = vrot.lane.b32.xlu0 %v1377, 32
        %v1442 = vpop.permute.xlu0 %1441
        %1443 = vrot.lane.b32.xlu0 %v965, 32
        %v1444 = vpop.permute.xlu0 %1443
        %1445 = vrot.lane.b32.xlu0 %v966, 32
        %v1446 = vpop.permute.xlu0 %1445
        %1447 = vrot.lane.b32.xlu0 %v967, 32
        %v1448 = vpop.permute.xlu0 %1447
        %1449 = vrot.lane.b32.xlu0 %v1378, 32
        %v1450 = vpop.permute.xlu0 %1449
        %vm1451 = vcmask 261120
        %v1452 = vsel %vm1451, %v1404, %v1406
        %v1453 = vsel %vm1451, %v1406, %v1408
        %v1454 = vsel %vm1451, %v1408, %v1410
        %v1455 = vsel %vm1451, %v1412, %v1414
        %v1456 = vsel %vm1451, %v1414, %v1416
        %v1457 = vsel %vm1451, %v1416, %v1418
        %v1458 = vsel %vm1451, %v1420, %v1422
        %v1459 = vsel %vm1451, %v1422, %v1424
        %v1460 = vsel %vm1451, %v1424, %v1426
        %v1461 = vsel %vm1451, %v1428, %v1430
        %v1462 = vsel %vm1451, %v1430, %v1432
        %v1463 = vsel %vm1451, %v1432, %v1434
        %v1464 = vsel %vm1451, %v1436, %v1438
        %v1465 = vsel %vm1451, %v1438, %v1440
        %v1466 = vsel %vm1451, %v1440, %v1442
        %v1467 = vsel %vm1451, %v1444, %v1446
        %v1468 = vsel %vm1451, %v1446, %v1448
        %v1469 = vsel %vm1451, %v1448, %v1450
        %v1488 = vadd.f32 %v1355, %v1452
        %v1489 = vadd.f32 %v1356, %v1453
        %v1490 = vadd.f32 %v1357, %v1454
        %v1491 = vadd.f32 %v1358, %v1455
        %v1492 = vadd.f32 %v1359, %v1456
        %v1493 = vadd.f32 %v1360, %v1457
        %v1494 = vadd.f32 %v1361, %v1458
        %v1495 = vadd.f32 %v1362, %v1459
        %v1496 = vadd.f32 %v1363, %v1460
        %v1497 = vadd.f32 %v1364, %v1461
        %v1498 = vadd.f32 %v1365, %v1462
        %v1499 = vadd.f32 %v1366, %v1463
        %v1500 = vadd.f32 %v1367, %v1464
        %v1501 = vadd.f32 %v1368, %v1465
        %v1502 = vadd.f32 %v1369, %v1466
        %v1503 = vadd.f32 %v1370, %v1467
        %v1504 = vadd.f32 %v1371, %v1468
        %v1505 = vadd.f32 %v1372, %v1469
        %v1506 = vmul.f32 %v1488, 0.12007838
        %v1507 = vmul.f32 %v1489, 0.12007838
        %v1508 = vmul.f32 %v1490, 0.12007838
        %v1509 = vmul.f32 %v1488, 0.23388074
        %v1510 = vmul.f32 %v1489, 0.23388074
        %v1511 = vmul.f32 %v1490, 0.23388074
        %v1512 = vmul.f32 %v1491, 0.23388074
        %v1513 = vmul.f32 %v1492, 0.23388074
        %v1514 = vmul.f32 %v1493, 0.23388074
        %vm1521 = vcmask 1046528
        %v1522 = vrot.slane %v1509, 1
        %v1523 = vrot.slane %v1512, 1
        %v1524 = vsel %vm1521, %v1522, %v1523
        %v1525 = vrot.slane %v1510, 1
        %v1526 = vrot.slane %v1513, 1
        %v1527 = vsel %vm1521, %v1525, %v1526
        %v1528 = vrot.slane %v1511, 1
        %v1529 = vrot.slane %v1514, 1
        %v1530 = vsel %vm1521, %v1528, %v1529
        %v1534 = vadd.f32 %v1506, %v1524
        %v1535 = vadd.f32 %v1507, %v1527
        %v1536 = vadd.f32 %v1508, %v1530
        %v1537 = vmul.f32 %v1488, 0.2920817
        %v1538 = vmul.f32 %v1489, 0.2920817
        %v1539 = vmul.f32 %v1490, 0.2920817
        %v1540 = vmul.f32 %v1491, 0.2920817
        %v1541 = vmul.f32 %v1492, 0.2920817
        %v1542 = vmul.f32 %v1493, 0.2920817
        %vm1549 = vcmask 1045504
        %v1550 = vrot.slane %v1537, 2
        %v1551 = vrot.slane %v1540, 2
        %v1552 = vsel %vm1549, %v1550, %v1551
        %v1553 = vrot.slane %v1538, 2
        %v1554 = vrot.slane %v1541, 2
        %v1555 = vsel %vm1549, %v1553, %v1554
        %v1556 = vrot.slane %v1539, 2
        %v1557 = vrot.slane %v1542, 2
        %v1558 = vsel %vm1549, %v1556, %v1557
        %v1562 = vadd.f32 %v1534, %v1552
        %v1563 = vadd.f32 %v1535, %v1555
        %v1564 = vadd.f32 %v1536, %v1558
        %vm1565 = vcmask 1044480
        %v1566 = vrot.slane %v1509, 3
        %v1567 = vrot.slane %v1512, 3
        %v1568 = vsel %vm1565, %v1566, %v1567
        %v1569 = vrot.slane %v1510, 3
        %v1570 = vrot.slane %v1513, 3
        %v1571 = vsel %vm1565, %v1569, %v1570
        %v1572 = vrot.slane %v1511, 3
        %v1573 = vrot.slane %v1514, 3
        %v1574 = vsel %vm1565, %v1572, %v1573
        %v1578 = vadd.f32 %v1562, %v1568
        %v1579 = vadd.f32 %v1563, %v1571
        %v1580 = vadd.f32 %v1564, %v1574
        %v1581 = vmul.f32 %v1491, 0.12007838
        %v1582 = vmul.f32 %v1492, 0.12007838
        %v1583 = vmul.f32 %v1493, 0.12007838
        %v1590 = vrot.slane %v1506, 4
        %v1591 = vrot.slane %v1581, 4
        %v1592 = vsel %vm289, %v1590, %v1591
        %v1593 = vrot.slane %v1507, 4
        %v1594 = vrot.slane %v1582, 4
        %v1595 = vsel %vm289, %v1593, %v1594
        %v1596 = vrot.slane %v1508, 4
        %v1597 = vrot.slane %v1583, 4
        %v1598 = vsel %vm289, %v1596, %v1597
        %v1602 = vadd.f32 %v1578, %v1592
        %v1603 = vadd.f32 %v1579, %v1595
        %v1604 = vadd.f32 %v1580, %v1598
        %v1605 = vmul.f32 %v1494, 0.12007838
        %v1606 = vmul.f32 %v1495, 0.12007838
        %v1607 = vmul.f32 %v1496, 0.12007838
        %v1608 = vmul.f32 %v1494, 0.23388074
        %v1609 = vmul.f32 %v1495, 0.23388074
        %v1610 = vmul.f32 %v1496, 0.23388074
        %v1614 = vrot.slane %v1608, 1
        %v1615 = vsel %vm1521, %v1523, %v1614
        %v1616 = vrot.slane %v1609, 1
        %v1617 = vsel %vm1521, %v1526, %v1616
        %v1618 = vrot.slane %v1610, 1
        %v1619 = vsel %vm1521, %v1529, %v1618
        %v1626 = vadd.f32 %v1581, %v1615
        %v1627 = vadd.f32 %v1582, %v1617
        %v1628 = vadd.f32 %v1583, %v1619
        %v1629 = vadd.f32 %v1605, %v1614
        %v1630 = vadd.f32 %v1606, %v1616
        %v1631 = vadd.f32 %v1607, %v1618
        %v1632 = vmul.f32 %v1494, 0.2920817
        %v1633 = vmul.f32 %v1495, 0.2920817
        %v1634 = vmul.f32 %v1496, 0.2920817
        %v1638 = vrot.slane %v1632, 2
        %v1639 = vsel %vm1549, %v1551, %v1638
        %v1640 = vrot.slane %v1633, 2
        %v1641 = vsel %vm1549, %v1554, %v1640
        %v1642 = vrot.slane %v1634, 2
        %v1643 = vsel %vm1549, %v1557, %v1642
        %v1650 = vadd.f32 %v1626, %v1639
        %v1651 = vadd.f32 %v1627, %v1641
        %v1652 = vadd.f32 %v1628, %v1643
        %v1653 = vadd.f32 %v1629, %v1638
        %v1654 = vadd.f32 %v1630, %v1640
        %v1655 = vadd.f32 %v1631, %v1642
        %v1656 = vrot.slane %v1608, 3
        %v1657 = vsel %vm1565, %v1567, %v1656
        %v1658 = vrot.slane %v1609, 3
        %v1659 = vsel %vm1565, %v1570, %v1658
        %v1660 = vrot.slane %v1610, 3
        %v1661 = vsel %vm1565, %v1573, %v1660
        %v1668 = vadd.f32 %v1650, %v1657
        %v1669 = vadd.f32 %v1651, %v1659
        %v1670 = vadd.f32 %v1652, %v1661
        %v1671 = vadd.f32 %v1653, %v1656
        %v1672 = vadd.f32 %v1654, %v1658
        %v1673 = vadd.f32 %v1655, %v1660
        %v1677 = vrot.slane %v1605, 4
        %v1678 = vrot.slane %v1606, 4
        %v1679 = vrot.slane %v1607, 4
        %v1683 = vadd.f32 %v1668, %v1677
        %v1684 = vadd.f32 %v1669, %v1678
        %v1685 = vadd.f32 %v1670, %v1679
        %v1686 = vadd.f32 %v1671, %v1677
        %v1687 = vadd.f32 %v1672, %v1678
        %v1688 = vadd.f32 %v1673, %v1679
        %v1689 = vmul.f32 %v1497, 0.12007838
        %v1690 = vmul.f32 %v1498, 0.12007838
        %v1691 = vmul.f32 %v1499, 0.12007838
        %v1692 = vmul.f32 %v1497, 0.23388074
        %v1693 = vmul.f32 %v1498, 0.23388074
        %v1694 = vmul.f32 %v1499, 0.23388074
        %v1695 = vmul.f32 %v1500, 0.23388074
        %v1696 = vmul.f32 %v1501, 0.23388074
        %v1697 = vmul.f32 %v1502, 0.23388074
        %v1704 = vrot.slane %v1692, 1
        %v1705 = vrot.slane %v1695, 1
        %v1706 = vsel %vm1521, %v1704, %v1705
        %v1707 = vrot.slane %v1693, 1
        %v1708 = vrot.slane %v1696, 1
        %v1709 = vsel %vm1521, %v1707, %v1708
        %v1710 = vrot.slane %v1694, 1
        %v1711 = vrot.slane %v1697, 1
        %v1712 = vsel %vm1521, %v1710, %v1711
        %v1716 = vadd.f32 %v1689, %v1706
        %v1717 = vadd.f32 %v1690, %v1709
        %v1718 = vadd.f32 %v1691, %v1712
        %v1719 = vmul.f32 %v1497, 0.2920817
        %v1720 = vmul.f32 %v1498, 0.2920817
        %v1721 = vmul.f32 %v1499, 0.2920817
        %v1722 = vmul.f32 %v1500, 0.2920817
        %v1723 = vmul.f32 %v1501, 0.2920817
        %v1724 = vmul.f32 %v1502, 0.2920817
        %v1731 = vrot.slane %v1719, 2
        %v1732 = vrot.slane %v1722, 2
        %v1733 = vsel %vm1549, %v1731, %v1732
        %v1734 = vrot.slane %v1720, 2
        %v1735 = vrot.slane %v1723, 2
        %v1736 = vsel %vm1549, %v1734, %v1735
        %v1737 = vrot.slane %v1721, 2
        %v1738 = vrot.slane %v1724, 2
        %v1739 = vsel %vm1549, %v1737, %v1738
        %v1743 = vadd.f32 %v1716, %v1733
        %v1744 = vadd.f32 %v1717, %v1736
        %v1745 = vadd.f32 %v1718, %v1739
        %v1746 = vrot.slane %v1692, 3
        %v1747 = vrot.slane %v1695, 3
        %v1748 = vsel %vm1565, %v1746, %v1747
        %v1749 = vrot.slane %v1693, 3
        %v1750 = vrot.slane %v1696, 3
        %v1751 = vsel %vm1565, %v1749, %v1750
        %v1752 = vrot.slane %v1694, 3
        %v1753 = vrot.slane %v1697, 3
        %v1754 = vsel %vm1565, %v1752, %v1753
        %v1758 = vadd.f32 %v1743, %v1748
        %v1759 = vadd.f32 %v1744, %v1751
        %v1760 = vadd.f32 %v1745, %v1754
        %v1761 = vmul.f32 %v1500, 0.12007838
        %v1762 = vmul.f32 %v1501, 0.12007838
        %v1763 = vmul.f32 %v1502, 0.12007838
        %v1770 = vrot.slane %v1689, 4
        %v1771 = vrot.slane %v1761, 4
        %v1772 = vsel %vm289, %v1770, %v1771
        %v1773 = vrot.slane %v1690, 4
        %v1774 = vrot.slane %v1762, 4
        %v1775 = vsel %vm289, %v1773, %v1774
        %v1776 = vrot.slane %v1691, 4
        %v1777 = vrot.slane %v1763, 4
        %v1778 = vsel %vm289, %v1776, %v1777
        %v1782 = vadd.f32 %v1758, %v1772
        %v1783 = vadd.f32 %v1759, %v1775
        %v1784 = vadd.f32 %v1760, %v1778
        %v1785 = vmul.f32 %v1503, 0.12007838
        %v1786 = vmul.f32 %v1504, 0.12007838
        %v1787 = vmul.f32 %v1505, 0.12007838
        %v1788 = vmul.f32 %v1503, 0.23388074
        %v1789 = vmul.f32 %v1504, 0.23388074
        %v1790 = vmul.f32 %v1505, 0.23388074
        %v1794 = vrot.slane %v1788, 1
        %v1795 = vsel %vm1521, %v1705, %v1794
        %v1796 = vrot.slane %v1789, 1
        %v1797 = vsel %vm1521, %v1708, %v1796
        %v1798 = vrot.slane %v1790, 1
        %v1799 = vsel %vm1521, %v1711, %v1798
        %v1806 = vadd.f32 %v1761, %v1795
        %v1807 = vadd.f32 %v1762, %v1797
        %v1808 = vadd.f32 %v1763, %v1799
        %v1809 = vadd.f32 %v1785, %v1794
        %v1810 = vadd.f32 %v1786, %v1796
        %v1811 = vadd.f32 %v1787, %v1798
        %v1812 = vmul.f32 %v1503, 0.2920817
        %v1813 = vmul.f32 %v1504, 0.2920817
        %v1814 = vmul.f32 %v1505, 0.2920817
        %v1818 = vrot.slane %v1812, 2
        %v1819 = vsel %vm1549, %v1732, %v1818
        %v1820 = vrot.slane %v1813, 2
        %v1821 = vsel %vm1549, %v1735, %v1820
        %v1822 = vrot.slane %v1814, 2
        %v1823 = vsel %vm1549, %v1738, %v1822
        %v1830 = vadd.f32 %v1806, %v1819
        %v1831 = vadd.f32 %v1807, %v1821
        %v1832 = vadd.f32 %v1808, %v1823
        %v1833 = vadd.f32 %v1809, %v1818
        %v1834 = vadd.f32 %v1810, %v1820
        %v1835 = vadd.f32 %v1811, %v1822
        %v1836 = vrot.slane %v1788, 3
        %v1837 = vsel %vm1565, %v1747, %v1836
        %v1838 = vrot.slane %v1789, 3
        %v1839 = vsel %vm1565, %v1750, %v1838
        %v1840 = vrot.slane %v1790, 3
        %v1841 = vsel %vm1565, %v1753, %v1840
        %v1848 = vadd.f32 %v1830, %v1837
        %v1849 = vadd.f32 %v1831, %v1839
        %v1850 = vadd.f32 %v1832, %v1841
        %v1851 = vadd.f32 %v1833, %v1836
        %v1852 = vadd.f32 %v1834, %v1838
        %v1853 = vadd.f32 %v1835, %v1840
        %v1857 = vrot.slane %v1785, 4
        %v1858 = vrot.slane %v1786, 4
        %v1859 = vrot.slane %v1787, 4
        %v1863 = vadd.f32 %v1848, %v1857
        %v1864 = vadd.f32 %v1849, %v1858
        %v1865 = vadd.f32 %v1850, %v1859
        %v1866 = vadd.f32 %v1851, %v1857
        %v1867 = vadd.f32 %v1852, %v1858
        %v1868 = vadd.f32 %v1853, %v1859
        %v1869 = vmul.f32 %v1602, %v1602
        %v1870 = vmul.f32 %v1603, %v1603
        %v1871 = vmul.f32 %v1604, %v1604
        %v1872 = vsub.f32 %v1782, %v1869
        %v1873 = vsub.f32 %v1783, %v1870
        %v1874 = vsub.f32 %v1784, %v1871
        %v1875 = vmax.f32 %v1872, 1e-08
        %v1876 = vmax.f32 %v1873, 1e-08
        %v1877 = vmax.f32 %v1874, 1e-08
        %v1878 = vmul.f32 %v1683, %v1683
        %v1879 = vmul.f32 %v1684, %v1684
        %v1880 = vmul.f32 %v1685, %v1685
        %v1881 = vmul.f32 %v1686, %v1686
        %v1882 = vmul.f32 %v1687, %v1687
        %v1883 = vmul.f32 %v1688, %v1688
        %v1884 = vsub.f32 %v1863, %v1878
        %v1885 = vsub.f32 %v1864, %v1879
        %v1886 = vsub.f32 %v1865, %v1880
        %v1887 = vsub.f32 %v1866, %v1881
        %v1888 = vsub.f32 %v1867, %v1882
        %v1889 = vsub.f32 %v1868, %v1883
        %v1890 = vmax.f32 %v1884, 1e-08
        %v1891 = vmax.f32 %v1885, 1e-08
        %v1892 = vmax.f32 %v1886, 1e-08
        %v1893 = vmax.f32 %v1887, 1e-08
        %v1894 = vmax.f32 %v1888, 1e-08
        %v1895 = vmax.f32 %v1889, 1e-08
        %v1902 = vrot.slane %v1683, 4
        %v1903 = vrot.slane %v1686, 4
        %v1904 = vsel %vm289, %v1902, %v1903
        %v1905 = vrot.slane %v1684, 4
        %v1906 = vrot.slane %v1687, 4
        %v1907 = vsel %vm289, %v1905, %v1906
        %v1908 = vrot.slane %v1685, 4
        %v1909 = vrot.slane %v1688, 4
        %v1910 = vsel %vm289, %v1908, %v1909
        %v1914 = vsub.f32 %v1602, %v1904
        %v1915 = vsub.f32 %v1603, %v1907
        %v1916 = vsub.f32 %v1604, %v1910
        %v1918 = vlaneseq
        %v1919 = vshrl.u32 %v1918, 7
        %v1920 = vsub.s32 0, %v1919
        %v1921 = vrot.slane %v264, %v1920
        %v1922 = vlaneseq
        %v1923 = vshrl.u32 %v1922, 7
        %v1924 = vsub.s32 1, %v1923
        %v1925 = vrot.slane %v264, %v1924
        %v1926 = vlaneseq
        %v1927 = vshrl.u32 %v1926, 7
        %v1928 = vsub.s32 2, %v1927
        %v1929 = vrot.slane %v264, %v1928
        %v1933 = vmul.f32 %v1914, %v1921
        %v1934 = vmul.f32 %v1915, %v1925
        %v1935 = vmul.f32 %v1916, %v1929
        %v1936 = vrsqrt.pop %v1875
        %v1937 = vmul.f32 %v1875, %v1936
        %vm1938 = vcmp.eq.f32.partialorder %v1875, inf
        %v1939 = vsel %vm1938, %v1875, %v1937
        %vm1940 = vcmp.eq.f32.partialorder %v1875, 0.0
        %v1941 = vand.u32 %v1875, 2147483648
        %v1942 = vsel %vm1940, %v1941, %v1939
        %v1943 = vrsqrt.pop %v1876
        %v1944 = vmul.f32 %v1876, %v1943
        %vm1945 = vcmp.eq.f32.partialorder %v1876, inf
        %v1946 = vsel %vm1945, %v1876, %v1944
        %vm1947 = vcmp.eq.f32.partialorder %v1876, 0.0
        %v1948 = vand.u32 %v1876, 2147483648
        %v1949 = vsel %vm1947, %v1948, %v1946
        %v1950 = vrsqrt.pop %v1877
        %v1951 = vmul.f32 %v1877, %v1950
        %vm1952 = vcmp.eq.f32.partialorder %v1877, inf
        %v1953 = vsel %vm1952, %v1877, %v1951
        %vm1954 = vcmp.eq.f32.partialorder %v1877, 0.0
        %v1955 = vand.u32 %v1877, 2147483648
        %v1956 = vsel %vm1954, %v1955, %v1953
        %v1957 = vrsqrt.pop %v1890
        %v1958 = vmul.f32 %v1890, %v1957
        %vm1959 = vcmp.eq.f32.partialorder %v1890, inf
        %v1960 = vsel %vm1959, %v1890, %v1958
        %vm1961 = vcmp.eq.f32.partialorder %v1890, 0.0
        %v1962 = vand.u32 %v1890, 2147483648
        %v1963 = vsel %vm1961, %v1962, %v1960
        %v1964 = vrsqrt.pop %v1891
        %v1965 = vmul.f32 %v1891, %v1964
        %vm1966 = vcmp.eq.f32.partialorder %v1891, inf
        %v1967 = vsel %vm1966, %v1891, %v1965
        %vm1968 = vcmp.eq.f32.partialorder %v1891, 0.0
        %v1969 = vand.u32 %v1891, 2147483648
        %v1970 = vsel %vm1968, %v1969, %v1967
        %v1971 = vrsqrt.pop %v1892
        %v1972 = vmul.f32 %v1892, %v1971
        %vm1973 = vcmp.eq.f32.partialorder %v1892, inf
        %v1974 = vsel %vm1973, %v1892, %v1972
        %vm1975 = vcmp.eq.f32.partialorder %v1892, 0.0
        %v1976 = vand.u32 %v1892, 2147483648
        %v1977 = vsel %vm1975, %v1976, %v1974
        %v1978 = vrsqrt.pop %v1893
        %v1979 = vmul.f32 %v1893, %v1978
        %vm1980 = vcmp.eq.f32.partialorder %v1893, inf
        %v1981 = vsel %vm1980, %v1893, %v1979
        %vm1982 = vcmp.eq.f32.partialorder %v1893, 0.0
        %v1983 = vand.u32 %v1893, 2147483648
        %v1984 = vsel %vm1982, %v1983, %v1981
        %v1985 = vrsqrt.pop %v1894
        %v1986 = vmul.f32 %v1894, %v1985
        %vm1987 = vcmp.eq.f32.partialorder %v1894, inf
        %v1988 = vsel %vm1987, %v1894, %v1986
        %vm1989 = vcmp.eq.f32.partialorder %v1894, 0.0
        %v1990 = vand.u32 %v1894, 2147483648
        %v1991 = vsel %vm1989, %v1990, %v1988
        %v1992 = vrsqrt.pop %v1895
        %v1993 = vmul.f32 %v1895, %v1992
        %vm1994 = vcmp.eq.f32.partialorder %v1895, inf
        %v1995 = vsel %vm1994, %v1895, %v1993
        %vm1996 = vcmp.eq.f32.partialorder %v1895, 0.0
        %v1997 = vand.u32 %v1895, 2147483648
        %v1998 = vsel %vm1996, %v1997, %v1995
        %v2005 = vrot.slane %v1963, 4
        %v2006 = vrot.slane %v1984, 4
        %v2007 = vsel %vm289, %v2005, %v2006
        %v2008 = vrot.slane %v1970, 4
        %v2009 = vrot.slane %v1991, 4
        %v2010 = vsel %vm289, %v2008, %v2009
        %v2011 = vrot.slane %v1977, 4
        %v2012 = vrot.slane %v1998, 4
        %v2013 = vsel %vm289, %v2011, %v2012
        %v2017 = vsub.f32 %v1942, %v2007
        %v2018 = vsub.f32 %v1949, %v2010
        %v2019 = vsub.f32 %v1956, %v2013
        %v2020 = vmul.f32 %v2017, %v1921
        %v2021 = vmul.f32 %v2018, %v1925
        %v2022 = vmul.f32 %v2019, %v1929
        %v2023 = vmul.f32 %v1933, %v1933
        %v2024 = vmul.f32 %v1934, %v1934
        %v2025 = vmul.f32 %v1935, %v1935
        %v2026 = vadd.f32 %v2023, %v2024
        %v2027 = vadd.f32 %v2026, %v2025
        %2028 = vadd.xlane.f32.xlu0 %v2027
        %v2029 = vpop.xlane.xlu0 %2028
        %v2030 = vrot.slane %v2029, 4
        %v2031 = vadd.f32 %v2029, %v2030
        %v2032 = vrot.slane %v2031, 2
        %v2033 = vadd.f32 %v2031, %v2032
        %v2034 = vrot.slane %v2033, 1
        %v2035 = vadd.f32 %v2033, %v2034
        %s2036 = vtos %v2035
        %v2037 = vmul.f32 %v2020, %v2020
        %v2038 = vmul.f32 %v2021, %v2021
        %v2039 = vmul.f32 %v2022, %v2022
        %v2040 = vadd.f32 %v2037, %v2038
        %v2041 = vadd.f32 %v2040, %v2039
        %2042 = vadd.xlane.f32.xlu0 %v2041
        %v2043 = vpop.xlane.xlu0 %2042
        %v2044 = vrot.slane %v2043, 4
        %v2045 = vadd.f32 %v2043, %v2044
        %v2046 = vrot.slane %v2045, 2
        %v2047 = vadd.f32 %v2045, %v2046
        %v2048 = vrot.slane %v2047, 1
        %v2049 = vadd.f32 %v2047, %v2048
        %s2050 = vtos %v2049
        %v2051 = vsub.f32 %v248, %v256
        %v2052 = vsub.f32 %v249, %v257
        %v2053 = vsub.f32 %v250, %v258
        %v2054 = vsub.f32 %v251, %v259
        %v2055 = vsub.f32 %v252, %v260
        %v2056 = vsub.f32 %v253, %v261
        %v2057 = vsub.f32 %v254, %v262
        %v2058 = vsub.f32 %v255, %v263
        %v2059 = vand.u32 2147483647, %v2051
        %v2060 = vand.u32 2147483647, %v2052
        %v2061 = vand.u32 2147483647, %v2053
        %v2062 = vand.u32 2147483647, %v2054
        %v2063 = vand.u32 2147483647, %v2055
        %v2064 = vand.u32 2147483647, %v2056
        %v2065 = vand.u32 2147483647, %v2057
        %v2066 = vand.u32 2147483647, %v2058
        %v2067 = vadd.f32 %v2059, %v2060
        %v2068 = vadd.f32 %v2067, %v2061
        %v2069 = vadd.f32 %v2068, %v2062
        %v2070 = vsel %vm289, %v2063, 0.0
        %v2071 = vadd.f32 %v2069, %v2070
        %v2072 = vsel %vm289, %v2064, 0.0
        %v2073 = vadd.f32 %v2071, %v2072
        %v2074 = vsel %vm289, %v2065, 0.0
        %v2075 = vadd.f32 %v2073, %v2074
        %v2076 = vsel %vm289, %v2066, 0.0
        %v2077 = vadd.f32 %v2075, %v2076
        %2078 = vadd.xlane.f32.xlu0 %v2077
        %v2079 = vpop.xlane.xlu0 %2078
        %v2080 = vrot.slane %v2079, 4
        %v2081 = vadd.f32 %v2079, %v2080
        %v2082 = vrot.slane %v2081, 2
        %v2083 = vadd.f32 %v2081, %v2082
        %v2084 = vrot.slane %v2083, 1
        %v2085 = vadd.f32 %v2083, %v2084
        %s2086 = vtos %v2085
        %v2087 = vadd.f32 %v248, %v249
        %v2088 = vadd.f32 %v2087, %v250
        %v2089 = vadd.f32 %v2088, %v251
        %v2090 = vsel %vm289, %v252, 0.0
        %v2091 = vadd.f32 %v2089, %v2090
        %v2092 = vsel %vm289, %v253, 0.0
        %v2093 = vadd.f32 %v2091, %v2092
        %v2094 = vsel %vm289, %v254, 0.0
        %v2095 = vadd.f32 %v2093, %v2094
        %v2096 = vsel %vm289, %v255, 0.0
        %v2097 = vadd.f32 %v2095, %v2096
        %2098 = vadd.xlane.f32.xlu0 %v2097
        %v2099 = vpop.xlane.xlu0 %2098
        %v2100 = vrot.slane %v2099, 4
        %v2101 = vadd.f32 %v2099, %v2100
        %v2102 = vrot.slane %v2101, 2
        %v2103 = vadd.f32 %v2101, %v2102
        %v2104 = vrot.slane %v2103, 1
        %v2105 = vadd.f32 %v2103, %v2104
        %s2106 = vtos %v2105
        %v2107 = vadd.f32 %v248, %v2090
        %v2108 = vrot.slane %v2107, 4
        %v2109 = vadd.f32 %v2107, %v2108
        %v2110 = vrot.slane %v2109, 2
        %v2111 = vadd.f32 %v2109, %v2110
        %v2112 = vrot.slane %v2111, 1
        %v2113 = vadd.f32 %v2111, %v2112
        %v2114 = vadd.f32 %v249, %v2092
        %v2115 = vrot.slane %v2114, 4
        %v2116 = vadd.f32 %v2114, %v2115
        %v2117 = vrot.slane %v2116, 2
        %v2118 = vadd.f32 %v2116, %v2117
        %v2119 = vrot.slane %v2118, 1
        %v2120 = vadd.f32 %v2118, %v2119
        %v2121 = vadd.f32 %v250, %v2094
        %v2122 = vrot.slane %v2121, 4
        %v2123 = vadd.f32 %v2121, %v2122
        %v2124 = vrot.slane %v2123, 2
        %v2125 = vadd.f32 %v2123, %v2124
        %v2126 = vrot.slane %v2125, 1
        %v2127 = vadd.f32 %v2125, %v2126
        %v2128 = vadd.f32 %v251, %v2096
        %v2129 = vrot.slane %v2128, 4
        %v2130 = vadd.f32 %v2128, %v2129
        %v2131 = vrot.slane %v2130, 2
        %v2132 = vadd.f32 %v2130, %v2131
        %v2133 = vrot.slane %v2132, 1
        %v2134 = vadd.f32 %v2132, %v2133
        %v2135 = vsel %vm289, %v269, 0.0
        %v2136 = vadd.f32 %v265, %v2135
        %v2137 = vrot.slane %v2136, 4
        %v2138 = vadd.f32 %v2136, %v2137
        %v2139 = vrot.slane %v2138, 2
        %v2140 = vadd.f32 %v2138, %v2139
        %v2141 = vrot.slane %v2140, 1
        %v2142 = vadd.f32 %v2140, %v2141
        %v2143 = vsel %vm289, %v270, 0.0
        %v2144 = vadd.f32 %v266, %v2143
        %v2145 = vrot.slane %v2144, 4
        %v2146 = vadd.f32 %v2144, %v2145
        %v2147 = vrot.slane %v2146, 2
        %v2148 = vadd.f32 %v2146, %v2147
        %v2149 = vrot.slane %v2148, 1
        %v2150 = vadd.f32 %v2148, %v2149
        %v2151 = vsel %vm289, %v271, 0.0
        %v2152 = vadd.f32 %v267, %v2151
        %v2153 = vrot.slane %v2152, 4
        %v2154 = vadd.f32 %v2152, %v2153
        %v2155 = vrot.slane %v2154, 2
        %v2156 = vadd.f32 %v2154, %v2155
        %v2157 = vrot.slane %v2156, 1
        %v2158 = vadd.f32 %v2156, %v2157
        %v2159 = vsel %vm289, %v272, 0.0
        %v2160 = vadd.f32 %v268, %v2159
        %v2161 = vrot.slane %v2160, 4
        %v2162 = vadd.f32 %v2160, %v2161
        %v2163 = vrot.slane %v2162, 2
        %v2164 = vadd.f32 %v2162, %v2163
        %v2165 = vrot.slane %v2164, 1
        %v2166 = vadd.f32 %v2164, %v2165
        %v2167 = vsel %vm289, %v260, 0.0
        %v2168 = vadd.f32 %v256, %v2167
        %v2169 = vrot.slane %v2168, 4
        %v2170 = vadd.f32 %v2168, %v2169
        %v2171 = vrot.slane %v2170, 2
        %v2172 = vadd.f32 %v2170, %v2171
        %v2173 = vrot.slane %v2172, 1
        %v2174 = vadd.f32 %v2172, %v2173
        %v2175 = vsel %vm289, %v261, 0.0
        %v2176 = vadd.f32 %v257, %v2175
        %v2177 = vrot.slane %v2176, 4
        %v2178 = vadd.f32 %v2176, %v2177
        %v2179 = vrot.slane %v2178, 2
        %v2180 = vadd.f32 %v2178, %v2179
        %v2181 = vrot.slane %v2180, 1
        %v2182 = vadd.f32 %v2180, %v2181
        %v2183 = vsel %vm289, %v262, 0.0
        %v2184 = vadd.f32 %v258, %v2183
        %v2185 = vrot.slane %v2184, 4
        %v2186 = vadd.f32 %v2184, %v2185
        %v2187 = vrot.slane %v2186, 2
        %v2188 = vadd.f32 %v2186, %v2187
        %v2189 = vrot.slane %v2188, 1
        %v2190 = vadd.f32 %v2188, %v2189
        %v2191 = vsel %vm289, %v263, 0.0
        %v2192 = vadd.f32 %v259, %v2191
        %v2193 = vrot.slane %v2192, 4
        %v2194 = vadd.f32 %v2192, %v2193
        %v2195 = vrot.slane %v2194, 2
        %v2196 = vadd.f32 %v2194, %v2195
        %v2197 = vrot.slane %v2196, 1
        %v2198 = vadd.f32 %v2196, %v2197
        %v2199 = vsel %vm289, %v277, 0.0
        %v2200 = vadd.f32 %v273, %v2199
        %v2201 = vrot.slane %v2200, 4
        %v2202 = vadd.f32 %v2200, %v2201
        %v2203 = vrot.slane %v2202, 2
        %v2204 = vadd.f32 %v2202, %v2203
        %v2205 = vrot.slane %v2204, 1
        %v2206 = vadd.f32 %v2204, %v2205
        %v2207 = vsel %vm289, %v278, 0.0
        %v2208 = vadd.f32 %v274, %v2207
        %v2209 = vrot.slane %v2208, 4
        %v2210 = vadd.f32 %v2208, %v2209
        %v2211 = vrot.slane %v2210, 2
        %v2212 = vadd.f32 %v2210, %v2211
        %v2213 = vrot.slane %v2212, 1
        %v2214 = vadd.f32 %v2212, %v2213
        %v2215 = vsel %vm289, %v279, 0.0
        %v2216 = vadd.f32 %v275, %v2215
        %v2217 = vrot.slane %v2216, 4
        %v2218 = vadd.f32 %v2216, %v2217
        %v2219 = vrot.slane %v2218, 2
        %v2220 = vadd.f32 %v2218, %v2219
        %v2221 = vrot.slane %v2220, 1
        %v2222 = vadd.f32 %v2220, %v2221
        %v2223 = vsel %vm289, %v280, 0.0
        %v2224 = vadd.f32 %v276, %v2223
        %v2225 = vrot.slane %v2224, 4
        %v2226 = vadd.f32 %v2224, %v2225
        %v2227 = vrot.slane %v2226, 2
        %v2228 = vadd.f32 %v2226, %v2227
        %v2229 = vrot.slane %v2228, 1
        %v2230 = vadd.f32 %v2228, %v2229
        %v2231 = vmul.f32 %v2113, %v2113
        %v2232 = vmul.f32 %v2120, %v2120
        %v2233 = vmul.f32 %v2127, %v2127
        %v2234 = vmul.f32 %v2134, %v2134
        %v2235 = vmul.f32 %v2231, 0.125
        %v2236 = vmul.f32 %v2232, 0.125
        %v2237 = vmul.f32 %v2233, 0.125
        %v2238 = vmul.f32 %v2234, 0.125
        %v2239 = vsub.f32 %v2142, %v2235
        %v2240 = vsub.f32 %v2150, %v2236
        %v2241 = vsub.f32 %v2158, %v2237
        %v2242 = vsub.f32 %v2166, %v2238
        %v2243 = vmax.f32 %v2239, 0.0
        %v2244 = vmax.f32 %v2240, 0.0
        %v2245 = vmax.f32 %v2241, 0.0
        %v2246 = vmax.f32 %v2242, 0.0
        %v2247 = vmul.f32 %v2243, 0.14285715
        %v2248 = vmul.f32 %v2244, 0.14285715
        %v2249 = vmul.f32 %v2245, 0.14285715
        %v2250 = vmul.f32 %v2246, 0.14285715
        %v2251 = vmul.f32 %v2174, %v2174
        %v2252 = vmul.f32 %v2182, %v2182
        %v2253 = vmul.f32 %v2190, %v2190
        %v2254 = vmul.f32 %v2198, %v2198
        %v2255 = vmul.f32 %v2251, 0.125
        %v2256 = vmul.f32 %v2252, 0.125
        %v2257 = vmul.f32 %v2253, 0.125
        %v2258 = vmul.f32 %v2254, 0.125
        %v2259 = vsub.f32 %v2206, %v2255
        %v2260 = vsub.f32 %v2214, %v2256
        %v2261 = vsub.f32 %v2222, %v2257
        %v2262 = vsub.f32 %v2230, %v2258
        %v2263 = vmax.f32 %v2259, 0.0
        %v2264 = vmax.f32 %v2260, 0.0
        %v2265 = vmax.f32 %v2261, 0.0
        %v2266 = vmax.f32 %v2262, 0.0
        %v2267 = vmul.f32 %v2263, 0.14285715
        %v2268 = vmul.f32 %v2264, 0.14285715
        %v2269 = vmul.f32 %v2265, 0.14285715
        %v2270 = vmul.f32 %v2266, 0.14285715
        %v2271 = vrsqrt.pop %v2247
        %v2272 = vmul.f32 %v2247, %v2271
        %vm2273 = vcmp.eq.f32.partialorder %v2247, inf
        %v2274 = vsel %vm2273, %v2247, %v2272
        %vm2275 = vcmp.eq.f32.partialorder %v2247, 0.0
        %v2276 = vand.u32 %v2247, 2147483648
        %v2277 = vsel %vm2275, %v2276, %v2274
        %v2278 = vrsqrt.pop %v2248
        %v2279 = vmul.f32 %v2248, %v2278
        %vm2280 = vcmp.eq.f32.partialorder %v2248, inf
        %v2281 = vsel %vm2280, %v2248, %v2279
        %vm2282 = vcmp.eq.f32.partialorder %v2248, 0.0
        %v2283 = vand.u32 %v2248, 2147483648
        %v2284 = vsel %vm2282, %v2283, %v2281
        %v2285 = vrsqrt.pop %v2249
        %v2286 = vmul.f32 %v2249, %v2285
        %vm2287 = vcmp.eq.f32.partialorder %v2249, inf
        %v2288 = vsel %vm2287, %v2249, %v2286
        %vm2289 = vcmp.eq.f32.partialorder %v2249, 0.0
        %v2290 = vand.u32 %v2249, 2147483648
        %v2291 = vsel %vm2289, %v2290, %v2288
        %v2292 = vrsqrt.pop %v2250
        %v2293 = vmul.f32 %v2250, %v2292
        %vm2294 = vcmp.eq.f32.partialorder %v2250, inf
        %v2295 = vsel %vm2294, %v2250, %v2293
        %vm2296 = vcmp.eq.f32.partialorder %v2250, 0.0
        %v2297 = vand.u32 %v2250, 2147483648
        %v2298 = vsel %vm2296, %v2297, %v2295
        %v2299 = vrsqrt.pop %v2267
        %v2300 = vmul.f32 %v2267, %v2299
        %vm2301 = vcmp.eq.f32.partialorder %v2267, inf
        %v2302 = vsel %vm2301, %v2267, %v2300
        %vm2303 = vcmp.eq.f32.partialorder %v2267, 0.0
        %v2304 = vand.u32 %v2267, 2147483648
        %v2305 = vsel %vm2303, %v2304, %v2302
        %v2306 = vrsqrt.pop %v2268
        %v2307 = vmul.f32 %v2268, %v2306
        %vm2308 = vcmp.eq.f32.partialorder %v2268, inf
        %v2309 = vsel %vm2308, %v2268, %v2307
        %vm2310 = vcmp.eq.f32.partialorder %v2268, 0.0
        %v2311 = vand.u32 %v2268, 2147483648
        %v2312 = vsel %vm2310, %v2311, %v2309
        %v2313 = vrsqrt.pop %v2269
        %v2314 = vmul.f32 %v2269, %v2313
        %vm2315 = vcmp.eq.f32.partialorder %v2269, inf
        %v2316 = vsel %vm2315, %v2269, %v2314
        %vm2317 = vcmp.eq.f32.partialorder %v2269, 0.0
        %v2318 = vand.u32 %v2269, 2147483648
        %v2319 = vsel %vm2317, %v2318, %v2316
        %v2320 = vrsqrt.pop %v2270
        %v2321 = vmul.f32 %v2270, %v2320
        %vm2322 = vcmp.eq.f32.partialorder %v2270, inf
        %v2323 = vsel %vm2322, %v2270, %v2321
        %vm2324 = vcmp.eq.f32.partialorder %v2270, 0.0
        %v2325 = vand.u32 %v2270, 2147483648
        %v2326 = vsel %vm2324, %v2325, %v2323
        %v2327 = vsub.f32 %v2277, %v2305
        %v2328 = vsub.f32 %v2284, %v2312
        %v2329 = vsub.f32 %v2291, %v2319
        %v2330 = vsub.f32 %v2298, %v2326
        %v2331 = vmul.f32 %v2327, %v2327
        %v2332 = vmul.f32 %v2328, %v2328
        %v2333 = vmul.f32 %v2329, %v2329
        %v2334 = vmul.f32 %v2330, %v2330
        %vm2335 = vcmask 1040384
        %v2336 = vsel %vm2335, %v2331, 0.0
        %v2337 = vsel %vm2335, %v2332, 0.0
        %v2338 = vadd.f32 %v2336, %v2337
        %v2339 = vsel %vm2335, %v2333, 0.0
        %v2340 = vadd.f32 %v2338, %v2339
        %v2341 = vsel %vm2335, %v2334, 0.0
        %v2342 = vadd.f32 %v2340, %v2341
        %2343 = vadd.xlane.f32.xlu0 %v2342
        %v2344 = vpop.xlane.xlu0 %2343
        %v2345 = vrot.slane %v2344, 4
        %v2346 = vadd.f32 %v2344, %v2345
        %v2347 = vrot.slane %v2346, 2
        %v2348 = vadd.f32 %v2346, %v2347
        %v2349 = vrot.slane %v2348, 1
        %v2350 = vadd.f32 %v2348, %v2349
        %s2351 = vtos %v2350
        %v2352 = vlaneseq
        %v2353 = vshrl.u32 %v2352, 7
        %vm2354 = vcmp.eq.s32.totalorder %v2353, 0
        %v2355 = vstv %s2036
        %v2356 = vsel %vm2354, %v2355, 0.0
        %vm2357 = vcmp.eq.s32.totalorder %v2353, 1
        %v2358 = vstv %s2050
        %v2359 = vsel %vm2357, %v2358, %v2356
        %vm2360 = vcmp.eq.s32.totalorder %v2353, 2
        %v2361 = vstv %s2086
        %v2362 = vsel %vm2360, %v2361, %v2359
        %vm2363 = vcmp.eq.s32.totalorder %v2353, 3
        %v2364 = vstv %s2106
        %v2365 = vsel %vm2363, %v2364, %v2362
        %vm2366 = vcmp.eq.s32.totalorder %v2353, 4
        %v2367 = vstv %s2351
        %v2368 = vsel %vm2366, %v2367, %v2365
        %2369 = vst [vmem:[%s225] sm:$0xff] %v2368
        %s2370 = sand.u32 %s121, 1
        %s2371 = scalar_lea.sflag [#allocation3], %s2370
        %s2372 = sand.u32 %s121, 1
        %s2373 = smul.addr %s2372, 8
        %s2374 = scalar_lea.vmem [#allocation2], %s2373
        // Predicated region
        $region33: #{tpu_custom_call.1} parent=31 // pred_check
          %p2375 = pneg %p131
        $region34: #{tpu_custom_call.1} parent=31 // pred_check_branch
          %2377 = sbr.rel (%p2375) target = $region36
        $region35: #{tpu_custom_call.1} parent=31 // pred_region
          %s2379 = ssub.s32 128, 128
          %2380 = vsyncadd %s2371, %s2379
          %s2381 = smul.addr %s21, 4
          %s2382 = sadd.s32 %s22, %s2381
          %s2383 = smul.addr %s2382, 128
          %s2384 = scalar_lea.hbm %s3, %s2383
          %s2386 = sshll.u32 %s2374, 4
          %s2387 = int_to_ptr.vmem [resolvable:$true] %s2386
          %2389 = dma.vmem_to_hbm [thread:$0]  %s2387, 128, %s2384, %s2371
        $region36: #{tpu_custom_call.1} parent=31 // pred_fallthru
          _
      $region32: #{tpu_custom_call.1} parent=5 // pred_fallthru
        _
      %p2390 = scmp.le.s32.totalorder 2, %s12
      // Predicated region
      $region37: #{tpu_custom_call.1} parent=5 // pred_check
        %p2391 = pneg %p2390
      $region38: #{tpu_custom_call.1} parent=5 // pred_check_branch
        %2393 = sbr.rel (%p2391) target = $region40
      $region39: #{tpu_custom_call.1} parent=5 // pred_region
        %s2394 = ssub.s32 %s12, 2
        // Predicated region
        $region41: #{tpu_custom_call.1} parent=39 // pred_check
          %p2395 = pneg %p137
        $region42: #{tpu_custom_call.1} parent=39 // pred_check_branch
          %2397 = sbr.rel (%p2395) target = $region44
        $region43: #{tpu_custom_call.1} parent=39 // pred_region
          %s2398 = sand.u32 %s122, 1
          %s2399 = scalar_lea.sflag [#allocation3], %s2398
          %s2400 = sand.u32 %s122, 1
          %s2401 = smul.addr %s2400, 8
          %s2402 = scalar_lea.vmem [#allocation2], %s2401
          %2403 = dma.done %s2399, 128
        $region44: #{tpu_custom_call.1} parent=39 // pred_fallthru
          _
      $region40: #{tpu_custom_call.1} parent=5 // pred_fallthru
        _
    $region6: #{tpu_custom_call.1} parent=1 // loop_footer
      %s16 = sadd.s32 1, %s12
    $region7: #{tpu_custom_call.1} parent=1 // loop_footer_branch
      %11 = sbr.rel target = $region3
    $region8: #{tpu_custom_call.1} parent=1 // loop_exit
      _
    %2404 = vsyncpa [#allocation3], 1
    %s2405 = scalar_lea.sflag [#allocation3], 1
    %2406 = vsyncpa %s2405, 1

</llo_original>
